<compile_context>
chip_gen: v6e
topology: v6e:2x2x1
jax: 0.10.0
libtpu: 0.0.40
codegen_flags: <defaults>
</compile_context>

<pallas_src>
import numpy as np
import jax
import jax.numpy as jnp
from jax import lax
from jax.experimental import pallas as pl
from jax.experimental.pallas import tpu as pltpu

CSUB = 8          # sublane width (channels x pack-halves)
SUM_LANES = 128   # lane width of the per-batch loss-partial output block

# packed-weights (8, 128) column layout (absolute lane offsets)
_DEN_BASE = 0     # cols  0..7  : denoise 1x1 weights  (block-diag over pack halves)
_SEGA_BASE = 8    # cols  8..15 : segment weights, "noisy"  half of the channel concat
_SEGL_BASE = 16   # cols 16..23 : segment weights, "latent" half of the channel concat
_FRAC_BASE = 24   # cols 24..39 : fractal one-hot weights (2 classes per pack half)
_TEMB_COL = 40    # col  40     : time-embedding bias column


# ----------------------------- fused Pallas kernel -----------------------------

def _make_fused_kernel(C, P):
    """Whole-p_losses kernel. grid = (B, hw_outer, hw_inner); first two axes 'parallel'."""
    PC = P * C  # number of real (non zero-padded) sublanes

    def kernel(sc_ref, a_ref, n_ref, f_ref, wpk_ref,
               a_noisy_ref, a_latent_ref, b_latent_ref,
               mask_v_ref, synt_a_ref, mask_f_ref, sums_ref):
        b = pl.program_id(0)
        # per-batch scalars (SMEM): q_sample coefficients + normalized timesteps
        c1a = sc_ref[0, b]
        c2a = sc_ref[1, b]
        c1b = sc_ref[2, b]
        c2b = sc_ref[3, b]
        sa = sc_ref[4, b]        # t_a / num_timesteps
        sb = sc_ref[5, b]        # t_b / num_timesteps

        a = a_ref[0]             # (8, T) f32, sublane = half*C + c (rows PC..7 zero if PC<8)
        n = n_ref[0]
        f = f_ref[0]
        wpk = wpk_ref[...]       # (8, 128) packed weights — one vreg, grid-invariant

        def col(j):              # (8, 1) weight column at absolute lane offset j
            return wpk[:, j:j + 1]

        def conv1x1(base, x):
            # y[s, :] = sum_ci wpk[s, base+ci] * x[ci, :]  — PC unrolled VPU FMAs
            # (block-diagonal weights keep the two packed spatial halves independent).
            acc = col(base) * x[0:1, :]
            for ci in range(1, PC):
                acc = acc + col(base + ci) * x[ci:ci + 1, :]
            return acc

        temb = col(_TEMB_COL)    # (8,1) time-embedding bias, lane-broadcast in the FMA below

        def denoise(x_noisy, t_scale):
            return conv1x1(_DEN_BASE, x_noisy) + t_scale * temb

        def segment(x_noisy, x_latent):
            # segment_fn(torch.cat([noisy, latent], dim=1)) with the concat folded into split
            # weights:  cat @ W_seg == noisy @ W_seg[:C] + latent @ W_seg[C:].
            return conv1x1(_SEGA_BASE, x_noisy) + conv1x1(_SEGL_BASE, x_latent)

        # ---------------- branch A ----------------
        A_noisy = c1a * a + c2a * n                      # q_sample(a_start, t_a)
        A_latent = denoise(A_noisy, sa)
        mask_V = segment(A_noisy, A_latent)

        # ---------------- branch B (+ fractal conditioning) ----------------
        B_noisy = c1b * a + c2b * n                      # q_sample(a_start, t_b)
        B_latent = denoise(B_noisy, sb)
        # fractal = one_hot(clamp_min(F[:, 0], 0).long(), 2) @ w_frac as masked FMAs,
        # one pair per packed spatial half (channel-0 row of half p sits on sublane p*C).
        frac = None
        for p in range(P):
            frp = jnp.floor(jnp.maximum(f[p * C:p * C + 1, :], 0.0))   # (1, T)
            term = (col(_FRAC_BASE + 2 * p) * (frp == 0.0).astype(jnp.float32)
                    + col(_FRAC_BASE + 2 * p + 1) * (frp == 1.0).astype(jnp.float32))
            frac = term if frac is None else frac + term
        synt_A = segment(B_noisy, B_latent) + frac

        # ---------------- cycle branch ----------------
        f_noisy = c1a * synt_A + c2a * n                 # q_sample(synt_A, t_a)
        f_recon = denoise(f_noisy, sa)
        mask_F = segment(f_noisy, f_recon)

        od = a_noisy_ref.dtype                           # bf16 store (math stays f32)
        a_noisy_ref[0] = A_noisy.astype(od)
        a_latent_ref[0] = A_latent.astype(od)
        b_latent_ref[0] = B_latent.astype(od)
        mask_v_ref[0] = mask_V.astype(od)
        synt_a_ref[0] = synt_A.astype(od)
        mask_f_ref[0] = mask_F.astype(od)

        # fused L1 partial sums (any zero-padded sublane rows are zero in both operands, so
        # full-tile sums equal the real-data sums).  Accumulated over the inner HW-tile axis;
        # the block index is fixed along that axis, so writeback to HBM happens only once.
        l_dif = jnp.sum(jnp.abs(n - B_latent))
        l_cyc = jnp.sum(jnp.abs(mask_F - f))
        row = lax.broadcasted_iota(jnp.int32, (2, SUM_LANES), 0)
        part = jnp.where(row == 0, l_dif, l_cyc)

        @pl.when(pl.program_id(2) == 0)
        def _():
            sums_ref[...] = jnp.zeros_like(sums_ref)

        sums_ref[...] += part[None, None]

    return kernel


# ----------------------------- module -----------------------------

class GaussianDiffusionPallas:
    """JAX/Pallas port of GaussianDiffusion.forward (= p_losses), loss_type='l1'."""

    MAX_HW_TILE = 8192  # lane-tile size cap (per packed-HW axis); ~5 MB of double-buffered VMEM

    def __init__(self, channels=4, image_size=16, num_timesteps=200,
                 linear_start=1e-4, linear_end=2e-2, act_dtype=jnp.bfloat16):
        assert channels <= CSUB, "surrogate networks assume C <= 8 channels"
        self.channels = channels
        self.image_size = image_size
        self.num_timesteps = num_timesteps
        self.act_dtype = act_dtype

        # set_new_noise_schedule (schedule='linear') — buffers used by q_sample
        betas = np.linspace(linear_start, linear_end, num_timesteps, dtype=np.float64)
        alphas_cumprod = np.cumprod(1.0 - betas)
        self.sqrt_alphas_cumprod = jnp.asarray(np.sqrt(alphas_cumprod), jnp.float32)
        self.sqrt_one_minus_alphas_cumprod = jnp.asarray(
            np.sqrt(1.0 - alphas_cumprod), jnp.float32)

        # deterministic synthetic parameters (denoise_fn / segment_fn surrogates)
        C = channels
        k1, k2, k3, k4 = jax.random.split(jax.random.PRNGKey(42), 4)
        self.w_den = 0.2 * jax.random.normal(k1, (C, C), jnp.float32)       # C -> C
        self.t_emb = 0.5 * jax.random.normal(k2, (C,), jnp.float32)         # time bias
        self.w_seg = 0.2 * jax.random.normal(k3, (2 * C, C), jnp.float32)   # 2C -> C
        self.w_frac = 0.2 * jax.random.normal(k4, (2, C), jnp.float32)      # fractal 2 -> C

        self._wpk_cache = {}
        self._run = jax.jit(self._p_losses_impl)

    # ---- packed-weights block: all weights + time-embedding in one lane-dense (8,128) ----

    def _packed_weights(self, P):
        if P in self._wpk_cache:
            return self._wpk_cache[P]
        C = self.channels
        w_den = np.asarray(self.w_den)
        w_seg = np.asarray(self.w_seg)
        w_frac = np.asarray(self.w_frac)
        t_emb = np.asarray(self.t_emb)
        wpk = np.zeros((CSUB, 128), np.float32)
        for p in range(P):
            rows = slice(p * C, (p + 1) * C)
            wpk[rows, _DEN_BASE + p * C:_DEN_BASE + (p + 1) * C] = w_den.T
            wpk[rows, _SEGA_BASE + p * C:_SEGA_BASE + (p + 1) * C] = w_seg[:C].T
            wpk[rows, _SEGL_BASE + p * C:_SEGL_BASE + (p + 1) * C] = w_seg[C:].T
            wpk[rows, _FRAC_BASE + 2 * p] = w_frac[0, :]
            wpk[rows, _FRAC_BASE + 2 * p + 1] = w_frac[1, :]
            wpk[rows, _TEMB_COL] = t_emb
        out = jnp.asarray(wpk)
        self._wpk_cache[P] = out
        return out

    # ---- NCHW <-> (B, 8, HW/P) dense-packed layout helpers ----

    def _pack_factor(self, HW):
        P = max(1, CSUB // self.channels)
        while P > 1 and HW % P != 0:
            P -= 1
        return P

    def _to_packed(self, x, P):
        B, C, H, W = x.shape
        hw2 = (H * W) // P
        x = x.astype(jnp.float32).reshape(B, C, P, hw2)
        x = jnp.transpose(x, (0, 2, 1, 3)).reshape(B, P * C, hw2)   # sublane = half*C + c
        if P * C < CSUB:
            x = jnp.pad(x, ((0, 0), (0, CSUB - P * C), (0, 0)))
        return x

    def _from_packed(self, y, H, W, P):
        B = y.shape[0]
        C = self.channels
        hw2 = y.shape[-1]
        y = y[:, :P * C, :].reshape(B, P, C, hw2)
        return jnp.transpose(y, (0, 2, 1, 3)).reshape(B, C, H, W)

    def _pick_tile(self, hw2):
        if hw2 <= self.MAX_HW_TILE:
            return hw2                     # single full-width tile (block == full dim)
        t = (self.MAX_HW_TILE // 128) * 128
        while t >= 128:
            if hw2 % t == 0:
                return t                   # largest 128-aligned divisor <= MAX_HW_TILE
            t -= 128
        # TODO(synk): spatial sizes with no 128-aligned divisor fall back to one full-width
        # tile (vmem_limit is scaled for it below); padding HW would perturb the L1 sums.
        return hw2

    # ---- fused p_losses body (jitted) ----

    def _p_losses_impl(self, a_start, F_gt, noise, t_a, t_b):
        B, C, H, W = a_start.shape
        assert C == self.channels
        HW = H * W
        P = self._pack_factor(HW)
        hw2 = HW // P
        thw = self._pick_tile(hw2)
        n_t = hw2 // thw
        n_o = 2 if (n_t >= 2 and n_t % 2 == 0) else 1   # outer parallel split (v7x 2nd TC)
        n_i = n_t // n_o

        a8 = self._to_packed(a_start, P)
        n8 = self._to_packed(noise, P)
        f8 = self._to_packed(F_gt, P)
        wpk = self._packed_weights(P)

        tf = jnp.float32
        sc = jnp.stack([
            self.sqrt_alphas_cumprod[t_a],
            self.sqrt_one_minus_alphas_cumprod[t_a],
            self.sqrt_alphas_cumprod[t_b],
            self.sqrt_one_minus_alphas_cumprod[t_b],
            t_a.astype(tf) / float(self.num_timesteps),
            t_b.astype(tf) / float(self.num_timesteps),
        ], axis=0)                                               # (6, B) f32 -> SMEM

        act_block = (1, CSUB, thw)
        act_idx = lambda b, o, h: (b, 0, o * n_i + h)
        act_spec = pl.BlockSpec(act_block, act_idx)
        w_spec = pl.BlockSpec((CSUB, 128), lambda b, o, h: (0, 0))   # grid-invariant weights

        act_dt = self.act_dtype
        out_shape = tuple(jax.ShapeDtypeStruct((B, CSUB, hw2), act_dt) for _ in range(6)) + (
            jax.ShapeDtypeStruct((B, n_o, 2, SUM_LANES), jnp.float32),)
        out_specs = tuple(pl.BlockSpec(act_block, act_idx) for _ in range(6)) + (
            pl.BlockSpec((1, 1, 2, SUM_LANES), lambda b, o, h: (b, o, 0, 0)),)

        # VMEM budget: double-buffered streams (3 f32 inputs + 6 act_dt outputs) + slack
        act_itemsize = jnp.dtype(act_dt).itemsize
        est = 2 * CSUB * thw * (3 * 4 + 6 * act_itemsize) + (2 << 20)
        vmem_limit = int(min(max(32 * 1024 * 1024, 2 * est), 100 * 1024 * 1024))

        kernel = _make_fused_kernel(C, P)
        outs = pl.pallas_call(
            kernel,
            out_shape=out_shape,
            grid=(B, n_o, n_i),
            in_specs=[
                pl.BlockSpec(memory_space=pltpu.MemorySpace.SMEM),   # per-batch scalars
                act_spec, act_spec, act_spec,                        # a_start, noise, F
                w_spec,                                              # packed weights + temb
            ],
            out_specs=out_specs,
            compiler_params=pltpu.CompilerParams(
                dimension_semantics=("parallel", "parallel", "arbitrary"),
                vmem_limit_bytes=vmem_limit),
        )(sc, a8, n8, f8, wpk)

        A_noisy8, A_latent8, B_latent8, mask_V8, synt_A8, mask_F8, sums = outs

        # l_dif = L1(sum)(noise, B_latent) / (b*c*h*w);  l_cyc = L1(mean)(mask_F, F)
        numel = float(B * C * H * W)
        l_dif = jnp.sum(sums[:, :, 0, 0]) / numel
        l_cyc = jnp.sum(sums[:, :, 1, 0]) / numel

        outs_nchw = [self._from_packed(v, H, W, P)
                     for v in (A_noisy8, A_latent8, B_latent8, mask_V8, synt_A8, mask_F8)]
        return outs_nchw, [l_dif, l_cyc]

    # ---- forward == p_losses ----

    def forward(self, x_in, key):
        a_start = x_in["A"]                  # (B, C, H, W)
        F_gt = x_in["F"].astype(jnp.float32)
        B = a_start.shape[0]

        k_noise, k_ta, k_tb = jax.random.split(key, 3)
        noise = jax.random.normal(k_noise, a_start.shape, jnp.float32)
        # Original module hardcodes randint(0, 200) for t_a; clamp to the schedule length so the
        # gather into the noise-schedule buffers cannot go out of range when num_timesteps != 200.
        t_a = jax.random.randint(k_ta, (B,), 0, min(200, self.num_timesteps))
        t_b = jax.random.randint(k_tb, (B,), 0, self.num_timesteps)

        return self._run(a_start, F_gt, noise, t_a, t_b)


# ----------------------------- demo -----------------------------

if __name__ == "__main__":
    key = jax.random.PRNGKey(0)
    k_a, k_f, k_fwd = jax.random.split(key, 3)

    B, C, H, W = 2, 4, 16, 16
    A = jax.random.normal(k_a, (B, C, H, W), jnp.float32)
    F_gt = jax.random.bernoulli(k_f, 0.5, (B, C, H, W)).astype(jnp.float32)

    model = GaussianDiffusionPallas(channels=C, image_size=H, num_timesteps=200)
    outs, losses = model.forward({"A": A, "F": F_gt}, k_fwd)

    jax.block_until_ready(outs)
    jax.block_until_ready(losses)

    assert all(o.shape == (B, C, H, W) for o in outs)
    assert all(bool(jnp.isfinite(l)) for l in losses)
    print("KERNEL_OK")
</pallas_src>

<mosaic_0001>
module attributes {stable_mosaic.version = 11 : i64} {
  func.func @kernel(%arg0: i32, %arg1: i32, %arg2: i32, %arg3: memref<6x2xf32, #tpu.memory_space<smem>>, %arg4: memref<1x8x128xf32, #tpu.memory_space<vmem>>, %arg5: memref<1x8x128xf32, #tpu.memory_space<vmem>>, %arg6: memref<1x8x128xf32, #tpu.memory_space<vmem>>, %arg7: memref<8x128xf32, #tpu.memory_space<vmem>>, %arg8: memref<1x8x128xbf16, #tpu.memory_space<vmem>>, %arg9: memref<1x8x128xbf16, #tpu.memory_space<vmem>>, %arg10: memref<1x8x128xbf16, #tpu.memory_space<vmem>>, %arg11: memref<1x8x128xbf16, #tpu.memory_space<vmem>>, %arg12: memref<1x8x128xbf16, #tpu.memory_space<vmem>>, %arg13: memref<1x8x128xbf16, #tpu.memory_space<vmem>>, %arg14: memref<1x1x2x128xf32, #tpu.memory_space<vmem>>) attributes {dimension_semantics = [#tpu.dimension_semantics<parallel>, #tpu.dimension_semantics<parallel>, #tpu.dimension_semantics<arbitrary>], iteration_bounds = array<i64: 2, 1, 1>, scalar_prefetch = 0 : i64, scratch_operands = 0 : i64, tpu.core_type = #tpu.core_type<tc>, window_params = [{transform_indices = @transform_0, window_bounds = array<i64: 6, 2>}, {transform_indices = @transform_1, window_bounds = array<i64: 1, 8, 128>}, {transform_indices = @transform_2, window_bounds = array<i64: 1, 8, 128>}, {transform_indices = @transform_3, window_bounds = array<i64: 1, 8, 128>}, {pipeline_mode = #tpu.pipeline_mode<synchronous>, transform_indices = @transform_4, window_bounds = array<i64: 8, 128>}, {transform_indices = @transform_5, window_bounds = array<i64: 1, 8, 128>}, {transform_indices = @transform_6, window_bounds = array<i64: 1, 8, 128>}, {transform_indices = @transform_7, window_bounds = array<i64: 1, 8, 128>}, {transform_indices = @transform_8, window_bounds = array<i64: 1, 8, 128>}, {transform_indices = @transform_9, window_bounds = array<i64: 1, 8, 128>}, {transform_indices = @transform_10, window_bounds = array<i64: 1, 8, 128>}, {transform_indices = @transform_11, window_bounds = array<i64: 1, 1, 2, 128>}]} {
    %c0 = arith.constant 0 : index
    %0 = arith.index_cast %arg0 : i32 to index
    %1 = memref.load %arg3[%c0, %0] : memref<6x2xf32, #tpu.memory_space<smem>>
    %c1 = arith.constant 1 : index
    %2 = arith.index_cast %arg0 : i32 to index
    %3 = memref.load %arg3[%c1, %2] : memref<6x2xf32, #tpu.memory_space<smem>>
    %c2 = arith.constant 2 : index
    %4 = arith.index_cast %arg0 : i32 to index
    %5 = memref.load %arg3[%c2, %4] : memref<6x2xf32, #tpu.memory_space<smem>>
    %c3 = arith.constant 3 : index
    %6 = arith.index_cast %arg0 : i32 to index
    %7 = memref.load %arg3[%c3, %6] : memref<6x2xf32, #tpu.memory_space<smem>>
    %c4 = arith.constant 4 : index
    %8 = arith.index_cast %arg0 : i32 to index
    %9 = memref.load %arg3[%c4, %8] : memref<6x2xf32, #tpu.memory_space<smem>>
    %c5 = arith.constant 5 : index
    %10 = arith.index_cast %arg0 : i32 to index
    %11 = memref.load %arg3[%c5, %10] : memref<6x2xf32, #tpu.memory_space<smem>>
    %c0_0 = arith.constant 0 : index
    %c0_1 = arith.constant 0 : index
    %c0_2 = arith.constant 0 : index
    %12 = vector.load %arg4[%c0_0, %c0_1, %c0_2] : memref<1x8x128xf32, #tpu.memory_space<vmem>>, vector<1x8x128xf32>
    %13 = vector.shape_cast %12 : vector<1x8x128xf32> to vector<8x128xf32>
    %c0_3 = arith.constant 0 : index
    %c0_4 = arith.constant 0 : index
    %c0_5 = arith.constant 0 : index
    %14 = vector.load %arg5[%c0_3, %c0_4, %c0_5] : memref<1x8x128xf32, #tpu.memory_space<vmem>>, vector<1x8x128xf32>
    %15 = vector.shape_cast %14 : vector<1x8x128xf32> to vector<8x128xf32>
    %c0_6 = arith.constant 0 : index
    %c0_7 = arith.constant 0 : index
    %c0_8 = arith.constant 0 : index
    %16 = vector.load %arg6[%c0_6, %c0_7, %c0_8] : memref<1x8x128xf32, #tpu.memory_space<vmem>>, vector<1x8x128xf32>
    %17 = vector.shape_cast %16 : vector<1x8x128xf32> to vector<8x128xf32>
    %c0_9 = arith.constant 0 : index
    %c0_10 = arith.constant 0 : index
    %18 = vector.load %arg7[%c0_9, %c0_10] : memref<8x128xf32, #tpu.memory_space<vmem>>, vector<8x128xf32>
    %19 = vector.extract_strided_slice %18 {offsets = [0, 40], sizes = [8, 1], strides = [1, 1]} : vector<8x128xf32> to vector<8x1xf32>
    %20 = vector.broadcast %1 : f32 to vector<8x128xf32>
    %21 = arith.mulf %20, %13 : vector<8x128xf32>
    %22 = vector.broadcast %3 : f32 to vector<8x128xf32>
    %23 = arith.mulf %22, %15 : vector<8x128xf32>
    %24 = arith.addf %21, %23 : vector<8x128xf32>
    %25 = vector.extract_strided_slice %18 {offsets = [0, 0], sizes = [8, 1], strides = [1, 1]} : vector<8x128xf32> to vector<8x1xf32>
    %26 = vector.extract_strided_slice %24 {offsets = [0, 0], sizes = [1, 128], strides = [1, 1]} : vector<8x128xf32> to vector<1x128xf32>
    %27 = vector.broadcast %25 : vector<8x1xf32> to vector<8x128xf32>
    %28 = vector.broadcast %26 : vector<1x128xf32> to vector<8x128xf32>
    %29 = arith.mulf %27, %28 : vector<8x128xf32>
    %30 = vector.extract_strided_slice %18 {offsets = [0, 1], sizes = [8, 1], strides = [1, 1]} : vector<8x128xf32> to vector<8x1xf32>
    %31 = vector.extract_strided_slice %24 {offsets = [1, 0], sizes = [1, 128], strides = [1, 1]} : vector<8x128xf32> to vector<1x128xf32>
    %32 = vector.broadcast %30 : vector<8x1xf32> to vector<8x128xf32>
    %33 = vector.broadcast %31 : vector<1x128xf32> to vector<8x128xf32>
    %34 = arith.mulf %32, %33 : vector<8x128xf32>
    %35 = arith.addf %29, %34 : vector<8x128xf32>
    %36 = vector.extract_strided_slice %18 {offsets = [0, 2], sizes = [8, 1], strides = [1, 1]} : vector<8x128xf32> to vector<8x1xf32>
    %37 = vector.extract_strided_slice %24 {offsets = [2, 0], sizes = [1, 128], strides = [1, 1]} : vector<8x128xf32> to vector<1x128xf32>
    %38 = vector.broadcast %36 : vector<8x1xf32> to vector<8x128xf32>
    %39 = vector.broadcast %37 : vector<1x128xf32> to vector<8x128xf32>
    %40 = arith.mulf %38, %39 : vector<8x128xf32>
    %41 = arith.addf %35, %40 : vector<8x128xf32>
    %42 = vector.extract_strided_slice %18 {offsets = [0, 3], sizes = [8, 1], strides = [1, 1]} : vector<8x128xf32> to vector<8x1xf32>
    %43 = vector.extract_strided_slice %24 {offsets = [3, 0], sizes = [1, 128], strides = [1, 1]} : vector<8x128xf32> to vector<1x128xf32>
    %44 = vector.broadcast %42 : vector<8x1xf32> to vector<8x128xf32>
    %45 = vector.broadcast %43 : vector<1x128xf32> to vector<8x128xf32>
    %46 = arith.mulf %44, %45 : vector<8x128xf32>
    %47 = arith.addf %41, %46 : vector<8x128xf32>
    %48 = vector.extract_strided_slice %18 {offsets = [0, 4], sizes = [8, 1], strides = [1, 1]} : vector<8x128xf32> to vector<8x1xf32>
    %49 = vector.extract_strided_slice %24 {offsets = [4, 0], sizes = [1, 128], strides = [1, 1]} : vector<8x128xf32> to vector<1x128xf32>
    %50 = vector.broadcast %48 : vector<8x1xf32> to vector<8x128xf32>
    %51 = vector.broadcast %49 : vector<1x128xf32> to vector<8x128xf32>
    %52 = arith.mulf %50, %51 : vector<8x128xf32>
    %53 = arith.addf %47, %52 : vector<8x128xf32>
    %54 = vector.extract_strided_slice %18 {offsets = [0, 5], sizes = [8, 1], strides = [1, 1]} : vector<8x128xf32> to vector<8x1xf32>
    %55 = vector.extract_strided_slice %24 {offsets = [5, 0], sizes = [1, 128], strides = [1, 1]} : vector<8x128xf32> to vector<1x128xf32>
    %56 = vector.broadcast %54 : vector<8x1xf32> to vector<8x128xf32>
    %57 = vector.broadcast %55 : vector<1x128xf32> to vector<8x128xf32>
    %58 = arith.mulf %56, %57 : vector<8x128xf32>
    %59 = arith.addf %53, %58 : vector<8x128xf32>
    %60 = vector.extract_strided_slice %18 {offsets = [0, 6], sizes = [8, 1], strides = [1, 1]} : vector<8x128xf32> to vector<8x1xf32>
    %61 = vector.extract_strided_slice %24 {offsets = [6, 0], sizes = [1, 128], strides = [1, 1]} : vector<8x128xf32> to vector<1x128xf32>
    %62 = vector.broadcast %60 : vector<8x1xf32> to vector<8x128xf32>
    %63 = vector.broadcast %61 : vector<1x128xf32> to vector<8x128xf32>
    %64 = arith.mulf %62, %63 : vector<8x128xf32>
    %65 = arith.addf %59, %64 : vector<8x128xf32>
    %66 = vector.extract_strided_slice %18 {offsets = [0, 7], sizes = [8, 1], strides = [1, 1]} : vector<8x128xf32> to vector<8x1xf32>
    %67 = vector.extract_strided_slice %24 {offsets = [7, 0], sizes = [1, 128], strides = [1, 1]} : vector<8x128xf32> to vector<1x128xf32>
    %68 = vector.broadcast %66 : vector<8x1xf32> to vector<8x128xf32>
    %69 = vector.broadcast %67 : vector<1x128xf32> to vector<8x128xf32>
    %70 = arith.mulf %68, %69 : vector<8x128xf32>
    %71 = arith.addf %65, %70 : vector<8x128xf32>
    %72 = vector.broadcast %9 : f32 to vector<8x1xf32>
    %73 = arith.mulf %72, %19 : vector<8x1xf32>
    %74 = vector.broadcast %73 : vector<8x1xf32> to vector<8x128xf32>
    %75 = arith.addf %71, %74 : vector<8x128xf32>
    %76 = vector.extract_strided_slice %18 {offsets = [0, 8], sizes = [8, 1], strides = [1, 1]} : vector<8x128xf32> to vector<8x1xf32>
    %77 = vector.extract_strided_slice %24 {offsets = [0, 0], sizes = [1, 128], strides = [1, 1]} : vector<8x128xf32> to vector<1x128xf32>
    %78 = vector.broadcast %76 : vector<8x1xf32> to vector<8x128xf32>
    %79 = vector.broadcast %77 : vector<1x128xf32> to vector<8x128xf32>
    %80 = arith.mulf %78, %79 : vector<8x128xf32>
    %81 = vector.extract_strided_slice %18 {offsets = [0, 9], sizes = [8, 1], strides = [1, 1]} : vector<8x128xf32> to vector<8x1xf32>
    %82 = vector.extract_strided_slice %24 {offsets = [1, 0], sizes = [1, 128], strides = [1, 1]} : vector<8x128xf32> to vector<1x128xf32>
    %83 = vector.broadcast %81 : vector<8x1xf32> to vector<8x128xf32>
    %84 = vector.broadcast %82 : vector<1x128xf32> to vector<8x128xf32>
    %85 = arith.mulf %83, %84 : vector<8x128xf32>
    %86 = arith.addf %80, %85 : vector<8x128xf32>
    %87 = vector.extract_strided_slice %18 {offsets = [0, 10], sizes = [8, 1], strides = [1, 1]} : vector<8x128xf32> to vector<8x1xf32>
    %88 = vector.extract_strided_slice %24 {offsets = [2, 0], sizes = [1, 128], strides = [1, 1]} : vector<8x128xf32> to vector<1x128xf32>
    %89 = vector.broadcast %87 : vector<8x1xf32> to vector<8x128xf32>
    %90 = vector.broadcast %88 : vector<1x128xf32> to vector<8x128xf32>
    %91 = arith.mulf %89, %90 : vector<8x128xf32>
    %92 = arith.addf %86, %91 : vector<8x128xf32>
    %93 = vector.extract_strided_slice %18 {offsets = [0, 11], sizes = [8, 1], strides = [1, 1]} : vector<8x128xf32> to vector<8x1xf32>
    %94 = vector.extract_strided_slice %24 {offsets = [3, 0], sizes = [1, 128], strides = [1, 1]} : vector<8x128xf32> to vector<1x128xf32>
    %95 = vector.broadcast %93 : vector<8x1xf32> to vector<8x128xf32>
    %96 = vector.broadcast %94 : vector<1x128xf32> to vector<8x128xf32>
    %97 = arith.mulf %95, %96 : vector<8x128xf32>
    %98 = arith.addf %92, %97 : vector<8x128xf32>
    %99 = vector.extract_strided_slice %18 {offsets = [0, 12], sizes = [8, 1], strides = [1, 1]} : vector<8x128xf32> to vector<8x1xf32>
    %100 = vector.extract_strided_slice %24 {offsets = [4, 0], sizes = [1, 128], strides = [1, 1]} : vector<8x128xf32> to vector<1x128xf32>
    %101 = vector.broadcast %99 : vector<8x1xf32> to vector<8x128xf32>
    %102 = vector.broadcast %100 : vector<1x128xf32> to vector<8x128xf32>
    %103 = arith.mulf %101, %102 : vector<8x128xf32>
    %104 = arith.addf %98, %103 : vector<8x128xf32>
    %105 = vector.extract_strided_slice %18 {offsets = [0, 13], sizes = [8, 1], strides = [1, 1]} : vector<8x128xf32> to vector<8x1xf32>
    %106 = vector.extract_strided_slice %24 {offsets = [5, 0], sizes = [1, 128], strides = [1, 1]} : vector<8x128xf32> to vector<1x128xf32>
    %107 = vector.broadcast %105 : vector<8x1xf32> to vector<8x128xf32>
    %108 = vector.broadcast %106 : vector<1x128xf32> to vector<8x128xf32>
    %109 = arith.mulf %107, %108 : vector<8x128xf32>
    %110 = arith.addf %104, %109 : vector<8x128xf32>
    %111 = vector.extract_strided_slice %18 {offsets = [0, 14], sizes = [8, 1], strides = [1, 1]} : vector<8x128xf32> to vector<8x1xf32>
    %112 = vector.extract_strided_slice %24 {offsets = [6, 0], sizes = [1, 128], strides = [1, 1]} : vector<8x128xf32> to vector<1x128xf32>
    %113 = vector.broadcast %111 : vector<8x1xf32> to vector<8x128xf32>
    %114 = vector.broadcast %112 : vector<1x128xf32> to vector<8x128xf32>
    %115 = arith.mulf %113, %114 : vector<8x128xf32>
    %116 = arith.addf %110, %115 : vector<8x128xf32>
    %117 = vector.extract_strided_slice %18 {offsets = [0, 15], sizes = [8, 1], strides = [1, 1]} : vector<8x128xf32> to vector<8x1xf32>
    %118 = vector.extract_strided_slice %24 {offsets = [7, 0], sizes = [1, 128], strides = [1, 1]} : vector<8x128xf32> to vector<1x128xf32>
    %119 = vector.broadcast %117 : vector<8x1xf32> to vector<8x128xf32>
    %120 = vector.broadcast %118 : vector<1x128xf32> to vector<8x128xf32>
    %121 = arith.mulf %119, %120 : vector<8x128xf32>
    %122 = arith.addf %116, %121 : vector<8x128xf32>
    %123 = vector.extract_strided_slice %18 {offsets = [0, 16], sizes = [8, 1], strides = [1, 1]} : vector<8x128xf32> to vector<8x1xf32>
    %124 = vector.extract_strided_slice %75 {offsets = [0, 0], sizes = [1, 128], strides = [1, 1]} : vector<8x128xf32> to vector<1x128xf32>
    %125 = vector.broadcast %123 : vector<8x1xf32> to vector<8x128xf32>
    %126 = vector.broadcast %124 : vector<1x128xf32> to vector<8x128xf32>
    %127 = arith.mulf %125, %126 : vector<8x128xf32>
    %128 = vector.extract_strided_slice %18 {offsets = [0, 17], sizes = [8, 1], strides = [1, 1]} : vector<8x128xf32> to vector<8x1xf32>
    %129 = vector.extract_strided_slice %75 {offsets = [1, 0], sizes = [1, 128], strides = [1, 1]} : vector<8x128xf32> to vector<1x128xf32>
    %130 = vector.broadcast %128 : vector<8x1xf32> to vector<8x128xf32>
    %131 = vector.broadcast %129 : vector<1x128xf32> to vector<8x128xf32>
    %132 = arith.mulf %130, %131 : vector<8x128xf32>
    %133 = arith.addf %127, %132 : vector<8x128xf32>
    %134 = vector.extract_strided_slice %18 {offsets = [0, 18], sizes = [8, 1], strides = [1, 1]} : vector<8x128xf32> to vector<8x1xf32>
    %135 = vector.extract_strided_slice %75 {offsets = [2, 0], sizes = [1, 128], strides = [1, 1]} : vector<8x128xf32> to vector<1x128xf32>
    %136 = vector.broadcast %134 : vector<8x1xf32> to vector<8x128xf32>
    %137 = vector.broadcast %135 : vector<1x128xf32> to vector<8x128xf32>
    %138 = arith.mulf %136, %137 : vector<8x128xf32>
    %139 = arith.addf %133, %138 : vector<8x128xf32>
    %140 = vector.extract_strided_slice %18 {offsets = [0, 19], sizes = [8, 1], strides = [1, 1]} : vector<8x128xf32> to vector<8x1xf32>
    %141 = vector.extract_strided_slice %75 {offsets = [3, 0], sizes = [1, 128], strides = [1, 1]} : vector<8x128xf32> to vector<1x128xf32>
    %142 = vector.broadcast %140 : vector<8x1xf32> to vector<8x128xf32>
    %143 = vector.broadcast %141 : vector<1x128xf32> to vector<8x128xf32>
    %144 = arith.mulf %142, %143 : vector<8x128xf32>
    %145 = arith.addf %139, %144 : vector<8x128xf32>
    %146 = vector.extract_strided_slice %18 {offsets = [0, 20], sizes = [8, 1], strides = [1, 1]} : vector<8x128xf32> to vector<8x1xf32>
    %147 = vector.extract_strided_slice %75 {offsets = [4, 0], sizes = [1, 128], strides = [1, 1]} : vector<8x128xf32> to vector<1x128xf32>
    %148 = vector.broadcast %146 : vector<8x1xf32> to vector<8x128xf32>
    %149 = vector.broadcast %147 : vector<1x128xf32> to vector<8x128xf32>
    %150 = arith.mulf %148, %149 : vector<8x128xf32>
    %151 = arith.addf %145, %150 : vector<8x128xf32>
    %152 = vector.extract_strided_slice %18 {offsets = [0, 21], sizes = [8, 1], strides = [1, 1]} : vector<8x128xf32> to vector<8x1xf32>
    %153 = vector.extract_strided_slice %75 {offsets = [5, 0], sizes = [1, 128], strides = [1, 1]} : vector<8x128xf32> to vector<1x128xf32>
    %154 = vector.broadcast %152 : vector<8x1xf32> to vector<8x128xf32>
    %155 = vector.broadcast %153 : vector<1x128xf32> to vector<8x128xf32>
    %156 = arith.mulf %154, %155 : vector<8x128xf32>
    %157 = arith.addf %151, %156 : vector<8x128xf32>
    %158 = vector.extract_strided_slice %18 {offsets = [0, 22], sizes = [8, 1], strides = [1, 1]} : vector<8x128xf32> to vector<8x1xf32>
    %159 = vector.extract_strided_slice %75 {offsets = [6, 0], sizes = [1, 128], strides = [1, 1]} : vector<8x128xf32> to vector<1x128xf32>
    %160 = vector.broadcast %158 : vector<8x1xf32> to vector<8x128xf32>
    %161 = vector.broadcast %159 : vector<1x128xf32> to vector<8x128xf32>
    %162 = arith.mulf %160, %161 : vector<8x128xf32>
    %163 = arith.addf %157, %162 : vector<8x128xf32>
    %164 = vector.extract_strided_slice %18 {offsets = [0, 23], sizes = [8, 1], strides = [1, 1]} : vector<8x128xf32> to vector<8x1xf32>
    %165 = vector.extract_strided_slice %75 {offsets = [7, 0], sizes = [1, 128], strides = [1, 1]} : vector<8x128xf32> to vector<1x128xf32>
    %166 = vector.broadcast %164 : vector<8x1xf32> to vector<8x128xf32>
    %167 = vector.broadcast %165 : vector<1x128xf32> to vector<8x128xf32>
    %168 = arith.mulf %166, %167 : vector<8x128xf32>
    %169 = arith.addf %163, %168 : vector<8x128xf32>
    %170 = arith.addf %122, %169 : vector<8x128xf32>
    %171 = vector.broadcast %5 : f32 to vector<8x128xf32>
    %172 = arith.mulf %171, %13 : vector<8x128xf32>
    %173 = vector.broadcast %7 : f32 to vector<8x128xf32>
    %174 = arith.mulf %173, %15 : vector<8x128xf32>
    %175 = arith.addf %172, %174 : vector<8x128xf32>
    %176 = vector.extract_strided_slice %18 {offsets = [0, 0], sizes = [8, 1], strides = [1, 1]} : vector<8x128xf32> to vector<8x1xf32>
    %177 = vector.extract_strided_slice %175 {offsets = [0, 0], sizes = [1, 128], strides = [1, 1]} : vector<8x128xf32> to vector<1x128xf32>
    %178 = vector.broadcast %176 : vector<8x1xf32> to vector<8x128xf32>
    %179 = vector.broadcast %177 : vector<1x128xf32> to vector<8x128xf32>
    %180 = arith.mulf %178, %179 : vector<8x128xf32>
    %181 = vector.extract_strided_slice %18 {offsets = [0, 1], sizes = [8, 1], strides = [1, 1]} : vector<8x128xf32> to vector<8x1xf32>
    %182 = vector.extract_strided_slice %175 {offsets = [1, 0], sizes = [1, 128], strides = [1, 1]} : vector<8x128xf32> to vector<1x128xf32>
    %183 = vector.broadcast %181 : vector<8x1xf32> to vector<8x128xf32>
    %184 = vector.broadcast %182 : vector<1x128xf32> to vector<8x128xf32>
    %185 = arith.mulf %183, %184 : vector<8x128xf32>
    %186 = arith.addf %180, %185 : vector<8x128xf32>
    %187 = vector.extract_strided_slice %18 {offsets = [0, 2], sizes = [8, 1], strides = [1, 1]} : vector<8x128xf32> to vector<8x1xf32>
    %188 = vector.extract_strided_slice %175 {offsets = [2, 0], sizes = [1, 128], strides = [1, 1]} : vector<8x128xf32> to vector<1x128xf32>
    %189 = vector.broadcast %187 : vector<8x1xf32> to vector<8x128xf32>
    %190 = vector.broadcast %188 : vector<1x128xf32> to vector<8x128xf32>
    %191 = arith.mulf %189, %190 : vector<8x128xf32>
    %192 = arith.addf %186, %191 : vector<8x128xf32>
    %193 = vector.extract_strided_slice %18 {offsets = [0, 3], sizes = [8, 1], strides = [1, 1]} : vector<8x128xf32> to vector<8x1xf32>
    %194 = vector.extract_strided_slice %175 {offsets = [3, 0], sizes = [1, 128], strides = [1, 1]} : vector<8x128xf32> to vector<1x128xf32>
    %195 = vector.broadcast %193 : vector<8x1xf32> to vector<8x128xf32>
    %196 = vector.broadcast %194 : vector<1x128xf32> to vector<8x128xf32>
    %197 = arith.mulf %195, %196 : vector<8x128xf32>
    %198 = arith.addf %192, %197 : vector<8x128xf32>
    %199 = vector.extract_strided_slice %18 {offsets = [0, 4], sizes = [8, 1], strides = [1, 1]} : vector<8x128xf32> to vector<8x1xf32>
    %200 = vector.extract_strided_slice %175 {offsets = [4, 0], sizes = [1, 128], strides = [1, 1]} : vector<8x128xf32> to vector<1x128xf32>
    %201 = vector.broadcast %199 : vector<8x1xf32> to vector<8x128xf32>
    %202 = vector.broadcast %200 : vector<1x128xf32> to vector<8x128xf32>
    %203 = arith.mulf %201, %202 : vector<8x128xf32>
    %204 = arith.addf %198, %203 : vector<8x128xf32>
    %205 = vector.extract_strided_slice %18 {offsets = [0, 5], sizes = [8, 1], strides = [1, 1]} : vector<8x128xf32> to vector<8x1xf32>
    %206 = vector.extract_strided_slice %175 {offsets = [5, 0], sizes = [1, 128], strides = [1, 1]} : vector<8x128xf32> to vector<1x128xf32>
    %207 = vector.broadcast %205 : vector<8x1xf32> to vector<8x128xf32>
    %208 = vector.broadcast %206 : vector<1x128xf32> to vector<8x128xf32>
    %209 = arith.mulf %207, %208 : vector<8x128xf32>
    %210 = arith.addf %204, %209 : vector<8x128xf32>
    %211 = vector.extract_strided_slice %18 {offsets = [0, 6], sizes = [8, 1], strides = [1, 1]} : vector<8x128xf32> to vector<8x1xf32>
    %212 = vector.extract_strided_slice %175 {offsets = [6, 0], sizes = [1, 128], strides = [1, 1]} : vector<8x128xf32> to vector<1x128xf32>
    %213 = vector.broadcast %211 : vector<8x1xf32> to vector<8x128xf32>
    %214 = vector.broadcast %212 : vector<1x128xf32> to vector<8x128xf32>
    %215 = arith.mulf %213, %214 : vector<8x128xf32>
    %216 = arith.addf %210, %215 : vector<8x128xf32>
    %217 = vector.extract_strided_slice %18 {offsets = [0, 7], sizes = [8, 1], strides = [1, 1]} : vector<8x128xf32> to vector<8x1xf32>
    %218 = vector.extract_strided_slice %175 {offsets = [7, 0], sizes = [1, 128], strides = [1, 1]} : vector<8x128xf32> to vector<1x128xf32>
    %219 = vector.broadcast %217 : vector<8x1xf32> to vector<8x128xf32>
    %220 = vector.broadcast %218 : vector<1x128xf32> to vector<8x128xf32>
    %221 = arith.mulf %219, %220 : vector<8x128xf32>
    %222 = arith.addf %216, %221 : vector<8x128xf32>
    %223 = vector.broadcast %11 : f32 to vector<8x1xf32>
    %224 = arith.mulf %223, %19 : vector<8x1xf32>
    %225 = vector.broadcast %224 : vector<8x1xf32> to vector<8x128xf32>
    %226 = arith.addf %222, %225 : vector<8x128xf32>
    %227 = vector.extract_strided_slice %17 {offsets = [0, 0], sizes = [1, 128], strides = [1, 1]} : vector<8x128xf32> to vector<1x128xf32>
    %cst = arith.constant 0.000000e+00 : f32
    %228 = vector.broadcast %cst : f32 to vector<1x128xf32>
    %229 = arith.maximumf %227, %228 : vector<1x128xf32>
    %230 = math.floor %229 : vector<1x128xf32>
    %231 = vector.extract_strided_slice %18 {offsets = [0, 24], sizes = [8, 1], strides = [1, 1]} : vector<8x128xf32> to vector<8x1xf32>
    %cst_11 = arith.constant 0.000000e+00 : f32
    %232 = vector.broadcast %cst_11 : f32 to vector<1x128xf32>
    %233 = arith.cmpf oeq, %230, %232 : vector<1x128xf32>
    %234 = arith.extui %233 : vector<1x128xi1> to vector<1x128xi32>
    %235 = arith.sitofp %234 : vector<1x128xi32> to vector<1x128xf32>
    %236 = vector.broadcast %231 : vector<8x1xf32> to vector<8x128xf32>
    %237 = vector.broadcast %235 : vector<1x128xf32> to vector<8x128xf32>
    %238 = arith.mulf %236, %237 : vector<8x128xf32>
    %239 = vector.extract_strided_slice %18 {offsets = [0, 25], sizes = [8, 1], strides = [1, 1]} : vector<8x128xf32> to vector<8x1xf32>
    %cst_12 = arith.constant 1.000000e+00 : f32
    %240 = vector.broadcast %cst_12 : f32 to vector<1x128xf32>
    %241 = arith.cmpf oeq, %230, %240 : vector<1x128xf32>
    %242 = arith.extui %241 : vector<1x128xi1> to vector<1x128xi32>
    %243 = arith.sitofp %242 : vector<1x128xi32> to vector<1x128xf32>
    %244 = vector.broadcast %239 : vector<8x1xf32> to vector<8x128xf32>
    %245 = vector.broadcast %243 : vector<1x128xf32> to vector<8x128xf32>
    %246 = arith.mulf %244, %245 : vector<8x128xf32>
    %247 = arith.addf %238, %246 : vector<8x128xf32>
    %248 = vector.extract_strided_slice %17 {offsets = [4, 0], sizes = [1, 128], strides = [1, 1]} : vector<8x128xf32> to vector<1x128xf32>
    %cst_13 = arith.constant 0.000000e+00 : f32
    %249 = vector.broadcast %cst_13 : f32 to vector<1x128xf32>
    %250 = arith.maximumf %248, %249 : vector<1x128xf32>
    %251 = math.floor %250 : vector<1x128xf32>
    %252 = vector.extract_strided_slice %18 {offsets = [0, 26], sizes = [8, 1], strides = [1, 1]} : vector<8x128xf32> to vector<8x1xf32>
    %cst_14 = arith.constant 0.000000e+00 : f32
    %253 = vector.broadcast %cst_14 : f32 to vector<1x128xf32>
    %254 = arith.cmpf oeq, %251, %253 : vector<1x128xf32>
    %255 = arith.extui %254 : vector<1x128xi1> to vector<1x128xi32>
    %256 = arith.sitofp %255 : vector<1x128xi32> to vector<1x128xf32>
    %257 = vector.broadcast %252 : vector<8x1xf32> to vector<8x128xf32>
    %258 = vector.broadcast %256 : vector<1x128xf32> to vector<8x128xf32>
    %259 = arith.mulf %257, %258 : vector<8x128xf32>
    %260 = vector.extract_strided_slice %18 {offsets = [0, 27], sizes = [8, 1], strides = [1, 1]} : vector<8x128xf32> to vector<8x1xf32>
    %cst_15 = arith.constant 1.000000e+00 : f32
    %261 = vector.broadcast %cst_15 : f32 to vector<1x128xf32>
    %262 = arith.cmpf oeq, %251, %261 : vector<1x128xf32>
    %263 = arith.extui %262 : vector<1x128xi1> to vector<1x128xi32>
    %264 = arith.sitofp %263 : vector<1x128xi32> to vector<1x128xf32>
    %265 = vector.broadcast %260 : vector<8x1xf32> to vector<8x128xf32>
    %266 = vector.broadcast %264 : vector<1x128xf32> to vector<8x128xf32>
    %267 = arith.mulf %265, %266 : vector<8x128xf32>
    %268 = arith.addf %259, %267 : vector<8x128xf32>
    %269 = arith.addf %247, %268 : vector<8x128xf32>
    %270 = vector.extract_strided_slice %18 {offsets = [0, 8], sizes = [8, 1], strides = [1, 1]} : vector<8x128xf32> to vector<8x1xf32>
    %271 = vector.extract_strided_slice %175 {offsets = [0, 0], sizes = [1, 128], strides = [1, 1]} : vector<8x128xf32> to vector<1x128xf32>
    %272 = vector.broadcast %270 : vector<8x1xf32> to vector<8x128xf32>
    %273 = vector.broadcast %271 : vector<1x128xf32> to vector<8x128xf32>
    %274 = arith.mulf %272, %273 : vector<8x128xf32>
    %275 = vector.extract_strided_slice %18 {offsets = [0, 9], sizes = [8, 1], strides = [1, 1]} : vector<8x128xf32> to vector<8x1xf32>
    %276 = vector.extract_strided_slice %175 {offsets = [1, 0], sizes = [1, 128], strides = [1, 1]} : vector<8x128xf32> to vector<1x128xf32>
    %277 = vector.broadcast %275 : vector<8x1xf32> to vector<8x128xf32>
    %278 = vector.broadcast %276 : vector<1x128xf32> to vector<8x128xf32>
    %279 = arith.mulf %277, %278 : vector<8x128xf32>
    %280 = arith.addf %274, %279 : vector<8x128xf32>
    %281 = vector.extract_strided_slice %18 {offsets = [0, 10], sizes = [8, 1], strides = [1, 1]} : vector<8x128xf32> to vector<8x1xf32>
    %282 = vector.extract_strided_slice %175 {offsets = [2, 0], sizes = [1, 128], strides = [1, 1]} : vector<8x128xf32> to vector<1x128xf32>
    %283 = vector.broadcast %281 : vector<8x1xf32> to vector<8x128xf32>
    %284 = vector.broadcast %282 : vector<1x128xf32> to vector<8x128xf32>
    %285 = arith.mulf %283, %284 : vector<8x128xf32>
    %286 = arith.addf %280, %285 : vector<8x128xf32>
    %287 = vector.extract_strided_slice %18 {offsets = [0, 11], sizes = [8, 1], strides = [1, 1]} : vector<8x128xf32> to vector<8x1xf32>
    %288 = vector.extract_strided_slice %175 {offsets = [3, 0], sizes = [1, 128], strides = [1, 1]} : vector<8x128xf32> to vector<1x128xf32>
    %289 = vector.broadcast %287 : vector<8x1xf32> to vector<8x128xf32>
    %290 = vector.broadcast %288 : vector<1x128xf32> to vector<8x128xf32>
    %291 = arith.mulf %289, %290 : vector<8x128xf32>
    %292 = arith.addf %286, %291 : vector<8x128xf32>
    %293 = vector.extract_strided_slice %18 {offsets = [0, 12], sizes = [8, 1], strides = [1, 1]} : vector<8x128xf32> to vector<8x1xf32>
    %294 = vector.extract_strided_slice %175 {offsets = [4, 0], sizes = [1, 128], strides = [1, 1]} : vector<8x128xf32> to vector<1x128xf32>
    %295 = vector.broadcast %293 : vector<8x1xf32> to vector<8x128xf32>
    %296 = vector.broadcast %294 : vector<1x128xf32> to vector<8x128xf32>
    %297 = arith.mulf %295, %296 : vector<8x128xf32>
    %298 = arith.addf %292, %297 : vector<8x128xf32>
    %299 = vector.extract_strided_slice %18 {offsets = [0, 13], sizes = [8, 1], strides = [1, 1]} : vector<8x128xf32> to vector<8x1xf32>
    %300 = vector.extract_strided_slice %175 {offsets = [5, 0], sizes = [1, 128], strides = [1, 1]} : vector<8x128xf32> to vector<1x128xf32>
    %301 = vector.broadcast %299 : vector<8x1xf32> to vector<8x128xf32>
    %302 = vector.broadcast %300 : vector<1x128xf32> to vector<8x128xf32>
    %303 = arith.mulf %301, %302 : vector<8x128xf32>
    %304 = arith.addf %298, %303 : vector<8x128xf32>
    %305 = vector.extract_strided_slice %18 {offsets = [0, 14], sizes = [8, 1], strides = [1, 1]} : vector<8x128xf32> to vector<8x1xf32>
    %306 = vector.extract_strided_slice %175 {offsets = [6, 0], sizes = [1, 128], strides = [1, 1]} : vector<8x128xf32> to vector<1x128xf32>
    %307 = vector.broadcast %305 : vector<8x1xf32> to vector<8x128xf32>
    %308 = vector.broadcast %306 : vector<1x128xf32> to vector<8x128xf32>
    %309 = arith.mulf %307, %308 : vector<8x128xf32>
    %310 = arith.addf %304, %309 : vector<8x128xf32>
    %311 = vector.extract_strided_slice %18 {offsets = [0, 15], sizes = [8, 1], strides = [1, 1]} : vector<8x128xf32> to vector<8x1xf32>
    %312 = vector.extract_strided_slice %175 {offsets = [7, 0], sizes = [1, 128], strides = [1, 1]} : vector<8x128xf32> to vector<1x128xf32>
    %313 = vector.broadcast %311 : vector<8x1xf32> to vector<8x128xf32>
    %314 = vector.broadcast %312 : vector<1x128xf32> to vector<8x128xf32>
    %315 = arith.mulf %313, %314 : vector<8x128xf32>
    %316 = arith.addf %310, %315 : vector<8x128xf32>
    %317 = vector.extract_strided_slice %18 {offsets = [0, 16], sizes = [8, 1], strides = [1, 1]} : vector<8x128xf32> to vector<8x1xf32>
    %318 = vector.extract_strided_slice %226 {offsets = [0, 0], sizes = [1, 128], strides = [1, 1]} : vector<8x128xf32> to vector<1x128xf32>
    %319 = vector.broadcast %317 : vector<8x1xf32> to vector<8x128xf32>
    %320 = vector.broadcast %318 : vector<1x128xf32> to vector<8x128xf32>
    %321 = arith.mulf %319, %320 : vector<8x128xf32>
    %322 = vector.extract_strided_slice %18 {offsets = [0, 17], sizes = [8, 1], strides = [1, 1]} : vector<8x128xf32> to vector<8x1xf32>
    %323 = vector.extract_strided_slice %226 {offsets = [1, 0], sizes = [1, 128], strides = [1, 1]} : vector<8x128xf32> to vector<1x128xf32>
    %324 = vector.broadcast %322 : vector<8x1xf32> to vector<8x128xf32>
    %325 = vector.broadcast %323 : vector<1x128xf32> to vector<8x128xf32>
    %326 = arith.mulf %324, %325 : vector<8x128xf32>
    %327 = arith.addf %321, %326 : vector<8x128xf32>
    %328 = vector.extract_strided_slice %18 {offsets = [0, 18], sizes = [8, 1], strides = [1, 1]} : vector<8x128xf32> to vector<8x1xf32>
    %329 = vector.extract_strided_slice %226 {offsets = [2, 0], sizes = [1, 128], strides = [1, 1]} : vector<8x128xf32> to vector<1x128xf32>
    %330 = vector.broadcast %328 : vector<8x1xf32> to vector<8x128xf32>
    %331 = vector.broadcast %329 : vector<1x128xf32> to vector<8x128xf32>
    %332 = arith.mulf %330, %331 : vector<8x128xf32>
    %333 = arith.addf %327, %332 : vector<8x128xf32>
    %334 = vector.extract_strided_slice %18 {offsets = [0, 19], sizes = [8, 1], strides = [1, 1]} : vector<8x128xf32> to vector<8x1xf32>
    %335 = vector.extract_strided_slice %226 {offsets = [3, 0], sizes = [1, 128], strides = [1, 1]} : vector<8x128xf32> to vector<1x128xf32>
    %336 = vector.broadcast %334 : vector<8x1xf32> to vector<8x128xf32>
    %337 = vector.broadcast %335 : vector<1x128xf32> to vector<8x128xf32>
    %338 = arith.mulf %336, %337 : vector<8x128xf32>
    %339 = arith.addf %333, %338 : vector<8x128xf32>
    %340 = vector.extract_strided_slice %18 {offsets = [0, 20], sizes = [8, 1], strides = [1, 1]} : vector<8x128xf32> to vector<8x1xf32>
    %341 = vector.extract_strided_slice %226 {offsets = [4, 0], sizes = [1, 128], strides = [1, 1]} : vector<8x128xf32> to vector<1x128xf32>
    %342 = vector.broadcast %340 : vector<8x1xf32> to vector<8x128xf32>
    %343 = vector.broadcast %341 : vector<1x128xf32> to vector<8x128xf32>
    %344 = arith.mulf %342, %343 : vector<8x128xf32>
    %345 = arith.addf %339, %344 : vector<8x128xf32>
    %346 = vector.extract_strided_slice %18 {offsets = [0, 21], sizes = [8, 1], strides = [1, 1]} : vector<8x128xf32> to vector<8x1xf32>
    %347 = vector.extract_strided_slice %226 {offsets = [5, 0], sizes = [1, 128], strides = [1, 1]} : vector<8x128xf32> to vector<1x128xf32>
    %348 = vector.broadcast %346 : vector<8x1xf32> to vector<8x128xf32>
    %349 = vector.broadcast %347 : vector<1x128xf32> to vector<8x128xf32>
    %350 = arith.mulf %348, %349 : vector<8x128xf32>
    %351 = arith.addf %345, %350 : vector<8x128xf32>
    %352 = vector.extract_strided_slice %18 {offsets = [0, 22], sizes = [8, 1], strides = [1, 1]} : vector<8x128xf32> to vector<8x1xf32>
    %353 = vector.extract_strided_slice %226 {offsets = [6, 0], sizes = [1, 128], strides = [1, 1]} : vector<8x128xf32> to vector<1x128xf32>
    %354 = vector.broadcast %352 : vector<8x1xf32> to vector<8x128xf32>
    %355 = vector.broadcast %353 : vector<1x128xf32> to vector<8x128xf32>
    %356 = arith.mulf %354, %355 : vector<8x128xf32>
    %357 = arith.addf %351, %356 : vector<8x128xf32>
    %358 = vector.extract_strided_slice %18 {offsets = [0, 23], sizes = [8, 1], strides = [1, 1]} : vector<8x128xf32> to vector<8x1xf32>
    %359 = vector.extract_strided_slice %226 {offsets = [7, 0], sizes = [1, 128], strides = [1, 1]} : vector<8x128xf32> to vector<1x128xf32>
    %360 = vector.broadcast %358 : vector<8x1xf32> to vector<8x128xf32>
    %361 = vector.broadcast %359 : vector<1x128xf32> to vector<8x128xf32>
    %362 = arith.mulf %360, %361 : vector<8x128xf32>
    %363 = arith.addf %357, %362 : vector<8x128xf32>
    %364 = arith.addf %316, %363 : vector<8x128xf32>
    %365 = arith.addf %364, %269 : vector<8x128xf32>
    %366 = vector.broadcast %1 : f32 to vector<8x128xf32>
    %367 = arith.mulf %366, %365 : vector<8x128xf32>
    %368 = vector.broadcast %3 : f32 to vector<8x128xf32>
    %369 = arith.mulf %368, %15 : vector<8x128xf32>
    %370 = arith.addf %367, %369 : vector<8x128xf32>
    %371 = vector.extract_strided_slice %18 {offsets = [0, 0], sizes = [8, 1], strides = [1, 1]} : vector<8x128xf32> to vector<8x1xf32>
    %372 = vector.extract_strided_slice %370 {offsets = [0, 0], sizes = [1, 128], strides = [1, 1]} : vector<8x128xf32> to vector<1x128xf32>
    %373 = vector.broadcast %371 : vector<8x1xf32> to vector<8x128xf32>
    %374 = vector.broadcast %372 : vector<1x128xf32> to vector<8x128xf32>
    %375 = arith.mulf %373, %374 : vector<8x128xf32>
    %376 = vector.extract_strided_slice %18 {offsets = [0, 1], sizes = [8, 1], strides = [1, 1]} : vector<8x128xf32> to vector<8x1xf32>
    %377 = vector.extract_strided_slice %370 {offsets = [1, 0], sizes = [1, 128], strides = [1, 1]} : vector<8x128xf32> to vector<1x128xf32>
    %378 = vector.broadcast %376 : vector<8x1xf32> to vector<8x128xf32>
    %379 = vector.broadcast %377 : vector<1x128xf32> to vector<8x128xf32>
    %380 = arith.mulf %378, %379 : vector<8x128xf32>
    %381 = arith.addf %375, %380 : vector<8x128xf32>
    %382 = vector.extract_strided_slice %18 {offsets = [0, 2], sizes = [8, 1], strides = [1, 1]} : vector<8x128xf32> to vector<8x1xf32>
    %383 = vector.extract_strided_slice %370 {offsets = [2, 0], sizes = [1, 128], strides = [1, 1]} : vector<8x128xf32> to vector<1x128xf32>
    %384 = vector.broadcast %382 : vector<8x1xf32> to vector<8x128xf32>
    %385 = vector.broadcast %383 : vector<1x128xf32> to vector<8x128xf32>
    %386 = arith.mulf %384, %385 : vector<8x128xf32>
    %387 = arith.addf %381, %386 : vector<8x128xf32>
    %388 = vector.extract_strided_slice %18 {offsets = [0, 3], sizes = [8, 1], strides = [1, 1]} : vector<8x128xf32> to vector<8x1xf32>
    %389 = vector.extract_strided_slice %370 {offsets = [3, 0], sizes = [1, 128], strides = [1, 1]} : vector<8x128xf32> to vector<1x128xf32>
    %390 = vector.broadcast %388 : vector<8x1xf32> to vector<8x128xf32>
    %391 = vector.broadcast %389 : vector<1x128xf32> to vector<8x128xf32>
    %392 = arith.mulf %390, %391 : vector<8x128xf32>
    %393 = arith.addf %387, %392 : vector<8x128xf32>
    %394 = vector.extract_strided_slice %18 {offsets = [0, 4], sizes = [8, 1], strides = [1, 1]} : vector<8x128xf32> to vector<8x1xf32>
    %395 = vector.extract_strided_slice %370 {offsets = [4, 0], sizes = [1, 128], strides = [1, 1]} : vector<8x128xf32> to vector<1x128xf32>
    %396 = vector.broadcast %394 : vector<8x1xf32> to vector<8x128xf32>
    %397 = vector.broadcast %395 : vector<1x128xf32> to vector<8x128xf32>
    %398 = arith.mulf %396, %397 : vector<8x128xf32>
    %399 = arith.addf %393, %398 : vector<8x128xf32>
    %400 = vector.extract_strided_slice %18 {offsets = [0, 5], sizes = [8, 1], strides = [1, 1]} : vector<8x128xf32> to vector<8x1xf32>
    %401 = vector.extract_strided_slice %370 {offsets = [5, 0], sizes = [1, 128], strides = [1, 1]} : vector<8x128xf32> to vector<1x128xf32>
    %402 = vector.broadcast %400 : vector<8x1xf32> to vector<8x128xf32>
    %403 = vector.broadcast %401 : vector<1x128xf32> to vector<8x128xf32>
    %404 = arith.mulf %402, %403 : vector<8x128xf32>
    %405 = arith.addf %399, %404 : vector<8x128xf32>
    %406 = vector.extract_strided_slice %18 {offsets = [0, 6], sizes = [8, 1], strides = [1, 1]} : vector<8x128xf32> to vector<8x1xf32>
    %407 = vector.extract_strided_slice %370 {offsets = [6, 0], sizes = [1, 128], strides = [1, 1]} : vector<8x128xf32> to vector<1x128xf32>
    %408 = vector.broadcast %406 : vector<8x1xf32> to vector<8x128xf32>
    %409 = vector.broadcast %407 : vector<1x128xf32> to vector<8x128xf32>
    %410 = arith.mulf %408, %409 : vector<8x128xf32>
    %411 = arith.addf %405, %410 : vector<8x128xf32>
    %412 = vector.extract_strided_slice %18 {offsets = [0, 7], sizes = [8, 1], strides = [1, 1]} : vector<8x128xf32> to vector<8x1xf32>
    %413 = vector.extract_strided_slice %370 {offsets = [7, 0], sizes = [1, 128], strides = [1, 1]} : vector<8x128xf32> to vector<1x128xf32>
    %414 = vector.broadcast %412 : vector<8x1xf32> to vector<8x128xf32>
    %415 = vector.broadcast %413 : vector<1x128xf32> to vector<8x128xf32>
    %416 = arith.mulf %414, %415 : vector<8x128xf32>
    %417 = arith.addf %411, %416 : vector<8x128xf32>
    %418 = vector.broadcast %9 : f32 to vector<8x1xf32>
    %419 = arith.mulf %418, %19 : vector<8x1xf32>
    %420 = vector.broadcast %419 : vector<8x1xf32> to vector<8x128xf32>
    %421 = arith.addf %417, %420 : vector<8x128xf32>
    %422 = vector.extract_strided_slice %18 {offsets = [0, 8], sizes = [8, 1], strides = [1, 1]} : vector<8x128xf32> to vector<8x1xf32>
    %423 = vector.extract_strided_slice %370 {offsets = [0, 0], sizes = [1, 128], strides = [1, 1]} : vector<8x128xf32> to vector<1x128xf32>
    %424 = vector.broadcast %422 : vector<8x1xf32> to vector<8x128xf32>
    %425 = vector.broadcast %423 : vector<1x128xf32> to vector<8x128xf32>
    %426 = arith.mulf %424, %425 : vector<8x128xf32>
    %427 = vector.extract_strided_slice %18 {offsets = [0, 9], sizes = [8, 1], strides = [1, 1]} : vector<8x128xf32> to vector<8x1xf32>
    %428 = vector.extract_strided_slice %370 {offsets = [1, 0], sizes = [1, 128], strides = [1, 1]} : vector<8x128xf32> to vector<1x128xf32>
    %429 = vector.broadcast %427 : vector<8x1xf32> to vector<8x128xf32>
    %430 = vector.broadcast %428 : vector<1x128xf32> to vector<8x128xf32>
    %431 = arith.mulf %429, %430 : vector<8x128xf32>
    %432 = arith.addf %426, %431 : vector<8x128xf32>
    %433 = vector.extract_strided_slice %18 {offsets = [0, 10], sizes = [8, 1], strides = [1, 1]} : vector<8x128xf32> to vector<8x1xf32>
    %434 = vector.extract_strided_slice %370 {offsets = [2, 0], sizes = [1, 128], strides = [1, 1]} : vector<8x128xf32> to vector<1x128xf32>
    %435 = vector.broadcast %433 : vector<8x1xf32> to vector<8x128xf32>
    %436 = vector.broadcast %434 : vector<1x128xf32> to vector<8x128xf32>
    %437 = arith.mulf %435, %436 : vector<8x128xf32>
    %438 = arith.addf %432, %437 : vector<8x128xf32>
    %439 = vector.extract_strided_slice %18 {offsets = [0, 11], sizes = [8, 1], strides = [1, 1]} : vector<8x128xf32> to vector<8x1xf32>
    %440 = vector.extract_strided_slice %370 {offsets = [3, 0], sizes = [1, 128], strides = [1, 1]} : vector<8x128xf32> to vector<1x128xf32>
    %441 = vector.broadcast %439 : vector<8x1xf32> to vector<8x128xf32>
    %442 = vector.broadcast %440 : vector<1x128xf32> to vector<8x128xf32>
    %443 = arith.mulf %441, %442 : vector<8x128xf32>
    %444 = arith.addf %438, %443 : vector<8x128xf32>
    %445 = vector.extract_strided_slice %18 {offsets = [0, 12], sizes = [8, 1], strides = [1, 1]} : vector<8x128xf32> to vector<8x1xf32>
    %446 = vector.extract_strided_slice %370 {offsets = [4, 0], sizes = [1, 128], strides = [1, 1]} : vector<8x128xf32> to vector<1x128xf32>
    %447 = vector.broadcast %445 : vector<8x1xf32> to vector<8x128xf32>
    %448 = vector.broadcast %446 : vector<1x128xf32> to vector<8x128xf32>
    %449 = arith.mulf %447, %448 : vector<8x128xf32>
    %450 = arith.addf %444, %449 : vector<8x128xf32>
    %451 = vector.extract_strided_slice %18 {offsets = [0, 13], sizes = [8, 1], strides = [1, 1]} : vector<8x128xf32> to vector<8x1xf32>
    %452 = vector.extract_strided_slice %370 {offsets = [5, 0], sizes = [1, 128], strides = [1, 1]} : vector<8x128xf32> to vector<1x128xf32>
    %453 = vector.broadcast %451 : vector<8x1xf32> to vector<8x128xf32>
    %454 = vector.broadcast %452 : vector<1x128xf32> to vector<8x128xf32>
    %455 = arith.mulf %453, %454 : vector<8x128xf32>
    %456 = arith.addf %450, %455 : vector<8x128xf32>
    %457 = vector.extract_strided_slice %18 {offsets = [0, 14], sizes = [8, 1], strides = [1, 1]} : vector<8x128xf32> to vector<8x1xf32>
    %458 = vector.extract_strided_slice %370 {offsets = [6, 0], sizes = [1, 128], strides = [1, 1]} : vector<8x128xf32> to vector<1x128xf32>
    %459 = vector.broadcast %457 : vector<8x1xf32> to vector<8x128xf32>
    %460 = vector.broadcast %458 : vector<1x128xf32> to vector<8x128xf32>
    %461 = arith.mulf %459, %460 : vector<8x128xf32>
    %462 = arith.addf %456, %461 : vector<8x128xf32>
    %463 = vector.extract_strided_slice %18 {offsets = [0, 15], sizes = [8, 1], strides = [1, 1]} : vector<8x128xf32> to vector<8x1xf32>
    %464 = vector.extract_strided_slice %370 {offsets = [7, 0], sizes = [1, 128], strides = [1, 1]} : vector<8x128xf32> to vector<1x128xf32>
    %465 = vector.broadcast %463 : vector<8x1xf32> to vector<8x128xf32>
    %466 = vector.broadcast %464 : vector<1x128xf32> to vector<8x128xf32>
    %467 = arith.mulf %465, %466 : vector<8x128xf32>
    %468 = arith.addf %462, %467 : vector<8x128xf32>
    %469 = vector.extract_strided_slice %18 {offsets = [0, 16], sizes = [8, 1], strides = [1, 1]} : vector<8x128xf32> to vector<8x1xf32>
    %470 = vector.extract_strided_slice %421 {offsets = [0, 0], sizes = [1, 128], strides = [1, 1]} : vector<8x128xf32> to vector<1x128xf32>
    %471 = vector.broadcast %469 : vector<8x1xf32> to vector<8x128xf32>
    %472 = vector.broadcast %470 : vector<1x128xf32> to vector<8x128xf32>
    %473 = arith.mulf %471, %472 : vector<8x128xf32>
    %474 = vector.extract_strided_slice %18 {offsets = [0, 17], sizes = [8, 1], strides = [1, 1]} : vector<8x128xf32> to vector<8x1xf32>
    %475 = vector.extract_strided_slice %421 {offsets = [1, 0], sizes = [1, 128], strides = [1, 1]} : vector<8x128xf32> to vector<1x128xf32>
    %476 = vector.broadcast %474 : vector<8x1xf32> to vector<8x128xf32>
    %477 = vector.broadcast %475 : vector<1x128xf32> to vector<8x128xf32>
    %478 = arith.mulf %476, %477 : vector<8x128xf32>
    %479 = arith.addf %473, %478 : vector<8x128xf32>
    %480 = vector.extract_strided_slice %18 {offsets = [0, 18], sizes = [8, 1], strides = [1, 1]} : vector<8x128xf32> to vector<8x1xf32>
    %481 = vector.extract_strided_slice %421 {offsets = [2, 0], sizes = [1, 128], strides = [1, 1]} : vector<8x128xf32> to vector<1x128xf32>
    %482 = vector.broadcast %480 : vector<8x1xf32> to vector<8x128xf32>
    %483 = vector.broadcast %481 : vector<1x128xf32> to vector<8x128xf32>
    %484 = arith.mulf %482, %483 : vector<8x128xf32>
    %485 = arith.addf %479, %484 : vector<8x128xf32>
    %486 = vector.extract_strided_slice %18 {offsets = [0, 19], sizes = [8, 1], strides = [1, 1]} : vector<8x128xf32> to vector<8x1xf32>
    %487 = vector.extract_strided_slice %421 {offsets = [3, 0], sizes = [1, 128], strides = [1, 1]} : vector<8x128xf32> to vector<1x128xf32>
    %488 = vector.broadcast %486 : vector<8x1xf32> to vector<8x128xf32>
    %489 = vector.broadcast %487 : vector<1x128xf32> to vector<8x128xf32>
    %490 = arith.mulf %488, %489 : vector<8x128xf32>
    %491 = arith.addf %485, %490 : vector<8x128xf32>
    %492 = vector.extract_strided_slice %18 {offsets = [0, 20], sizes = [8, 1], strides = [1, 1]} : vector<8x128xf32> to vector<8x1xf32>
    %493 = vector.extract_strided_slice %421 {offsets = [4, 0], sizes = [1, 128], strides = [1, 1]} : vector<8x128xf32> to vector<1x128xf32>
    %494 = vector.broadcast %492 : vector<8x1xf32> to vector<8x128xf32>
    %495 = vector.broadcast %493 : vector<1x128xf32> to vector<8x128xf32>
    %496 = arith.mulf %494, %495 : vector<8x128xf32>
    %497 = arith.addf %491, %496 : vector<8x128xf32>
    %498 = vector.extract_strided_slice %18 {offsets = [0, 21], sizes = [8, 1], strides = [1, 1]} : vector<8x128xf32> to vector<8x1xf32>
    %499 = vector.extract_strided_slice %421 {offsets = [5, 0], sizes = [1, 128], strides = [1, 1]} : vector<8x128xf32> to vector<1x128xf32>
    %500 = vector.broadcast %498 : vector<8x1xf32> to vector<8x128xf32>
    %501 = vector.broadcast %499 : vector<1x128xf32> to vector<8x128xf32>
    %502 = arith.mulf %500, %501 : vector<8x128xf32>
    %503 = arith.addf %497, %502 : vector<8x128xf32>
    %504 = vector.extract_strided_slice %18 {offsets = [0, 22], sizes = [8, 1], strides = [1, 1]} : vector<8x128xf32> to vector<8x1xf32>
    %505 = vector.extract_strided_slice %421 {offsets = [6, 0], sizes = [1, 128], strides = [1, 1]} : vector<8x128xf32> to vector<1x128xf32>
    %506 = vector.broadcast %504 : vector<8x1xf32> to vector<8x128xf32>
    %507 = vector.broadcast %505 : vector<1x128xf32> to vector<8x128xf32>
    %508 = arith.mulf %506, %507 : vector<8x128xf32>
    %509 = arith.addf %503, %508 : vector<8x128xf32>
    %510 = vector.extract_strided_slice %18 {offsets = [0, 23], sizes = [8, 1], strides = [1, 1]} : vector<8x128xf32> to vector<8x1xf32>
    %511 = vector.extract_strided_slice %421 {offsets = [7, 0], sizes = [1, 128], strides = [1, 1]} : vector<8x128xf32> to vector<1x128xf32>
    %512 = vector.broadcast %510 : vector<8x1xf32> to vector<8x128xf32>
    %513 = vector.broadcast %511 : vector<1x128xf32> to vector<8x128xf32>
    %514 = arith.mulf %512, %513 : vector<8x128xf32>
    %515 = arith.addf %509, %514 : vector<8x128xf32>
    %516 = arith.addf %468, %515 : vector<8x128xf32>
    %517 = arith.truncf %24 : vector<8x128xf32> to vector<8x128xbf16>
    %c0_16 = arith.constant 0 : index
    %c0_17 = arith.constant 0 : index
    %c0_18 = arith.constant 0 : index
    %518 = vector.load %arg8[%c0_16, %c0_17, %c0_18] : memref<1x8x128xbf16, #tpu.memory_space<vmem>>, vector<1x8x128xbf16>
    %519 = vector.shape_cast %518 : vector<1x8x128xbf16> to vector<8x128xbf16>
    %520 = vector.shape_cast %517 : vector<8x128xbf16> to vector<1x8x128xbf16>
    tpu.vector_store %arg8[%c0_16, %c0_17, %c0_18], %520 {strides = array<i32>} : memref<1x8x128xbf16, #tpu.memory_space<vmem>>, vector<1x8x128xbf16>,
    %521 = arith.truncf %75 : vector<8x128xf32> to vector<8x128xbf16>
    %c0_19 = arith.constant 0 : index
    %c0_20 = arith.constant 0 : index
    %c0_21 = arith.constant 0 : index
    %522 = vector.load %arg9[%c0_19, %c0_20, %c0_21] : memref<1x8x128xbf16, #tpu.memory_space<vmem>>, vector<1x8x128xbf16>
    %523 = vector.shape_cast %522 : vector<1x8x128xbf16> to vector<8x128xbf16>
    %524 = vector.shape_cast %521 : vector<8x128xbf16> to vector<1x8x128xbf16>
    tpu.vector_store %arg9[%c0_19, %c0_20, %c0_21], %524 {strides = array<i32>} : memref<1x8x128xbf16, #tpu.memory_space<vmem>>, vector<1x8x128xbf16>,
    %525 = arith.truncf %226 : vector<8x128xf32> to vector<8x128xbf16>
    %c0_22 = arith.constant 0 : index
    %c0_23 = arith.constant 0 : index
    %c0_24 = arith.constant 0 : index
    %526 = vector.load %arg10[%c0_22, %c0_23, %c0_24] : memref<1x8x128xbf16, #tpu.memory_space<vmem>>, vector<1x8x128xbf16>
    %527 = vector.shape_cast %526 : vector<1x8x128xbf16> to vector<8x128xbf16>
    %528 = vector.shape_cast %525 : vector<8x128xbf16> to vector<1x8x128xbf16>
    tpu.vector_store %arg10[%c0_22, %c0_23, %c0_24], %528 {strides = array<i32>} : memref<1x8x128xbf16, #tpu.memory_space<vmem>>, vector<1x8x128xbf16>,
    %529 = arith.truncf %170 : vector<8x128xf32> to vector<8x128xbf16>
    %c0_25 = arith.constant 0 : index
    %c0_26 = arith.constant 0 : index
    %c0_27 = arith.constant 0 : index
    %530 = vector.load %arg11[%c0_25, %c0_26, %c0_27] : memref<1x8x128xbf16, #tpu.memory_space<vmem>>, vector<1x8x128xbf16>
    %531 = vector.shape_cast %530 : vector<1x8x128xbf16> to vector<8x128xbf16>
    %532 = vector.shape_cast %529 : vector<8x128xbf16> to vector<1x8x128xbf16>
    tpu.vector_store %arg11[%c0_25, %c0_26, %c0_27], %532 {strides = array<i32>} : memref<1x8x128xbf16, #tpu.memory_space<vmem>>, vector<1x8x128xbf16>,
    %533 = arith.truncf %365 : vector<8x128xf32> to vector<8x128xbf16>
    %c0_28 = arith.constant 0 : index
    %c0_29 = arith.constant 0 : index
    %c0_30 = arith.constant 0 : index
    %534 = vector.load %arg12[%c0_28, %c0_29, %c0_30] : memref<1x8x128xbf16, #tpu.memory_space<vmem>>, vector<1x8x128xbf16>
    %535 = vector.shape_cast %534 : vector<1x8x128xbf16> to vector<8x128xbf16>
    %536 = vector.shape_cast %533 : vector<8x128xbf16> to vector<1x8x128xbf16>
    tpu.vector_store %arg12[%c0_28, %c0_29, %c0_30], %536 {strides = array<i32>} : memref<1x8x128xbf16, #tpu.memory_space<vmem>>, vector<1x8x128xbf16>,
    %537 = arith.truncf %516 : vector<8x128xf32> to vector<8x128xbf16>
    %c0_31 = arith.constant 0 : index
    %c0_32 = arith.constant 0 : index
    %c0_33 = arith.constant 0 : index
    %538 = vector.load %arg13[%c0_31, %c0_32, %c0_33] : memref<1x8x128xbf16, #tpu.memory_space<vmem>>, vector<1x8x128xbf16>
    %539 = vector.shape_cast %538 : vector<1x8x128xbf16> to vector<8x128xbf16>
    %540 = vector.shape_cast %537 : vector<8x128xbf16> to vector<1x8x128xbf16>
    tpu.vector_store %arg13[%c0_31, %c0_32, %c0_33], %540 {strides = array<i32>} : memref<1x8x128xbf16, #tpu.memory_space<vmem>>, vector<1x8x128xbf16>,
    %541 = arith.subf %15, %226 : vector<8x128xf32>
    %542 = math.absf %541 : vector<8x128xf32>
    %543 = vector.shape_cast %542 : vector<8x128xf32> to vector<1x8x128xf32>
    %cst_34 = arith.constant dense<0.000000e+00> : vector<1xf32>
    %544 = vector.multi_reduction <add>, %543, %cst_34 [1, 2] : vector<1x8x128xf32> to vector<1xf32>
    %545 = vector.shape_cast %544 : vector<1xf32> to vector<1x1x1xf32>
    %546 = vector.extract %545[0, 0, 0] : f32 from vector<1x1x1xf32>
    %547 = arith.subf %516, %17 : vector<8x128xf32>
    %548 = math.absf %547 : vector<8x128xf32>
    %549 = vector.shape_cast %548 : vector<8x128xf32> to vector<1x8x128xf32>
    %cst_35 = arith.constant dense<0.000000e+00> : vector<1xf32>
    %550 = vector.multi_reduction <add>, %549, %cst_35 [1, 2] : vector<1x8x128xf32> to vector<1xf32>
    %551 = vector.shape_cast %550 : vector<1xf32> to vector<1x1x1xf32>
    %552 = vector.extract %551[0, 0, 0] : f32 from vector<1x1x1xf32>
    %553 = tpu.iota {dimensions = array<i32: 0>} : vector<2x128xi32>
    %c0_i32 = arith.constant 0 : i32
    %554 = vector.broadcast %c0_i32 : i32 to vector<2x128xi32>
    %555 = arith.cmpi eq, %553, %554 : vector<2x128xi32>
    %556 = vector.broadcast %546 : f32 to vector<2x128xf32>
    %557 = vector.broadcast %552 : f32 to vector<2x128xf32>
    %558 = arith.select %555, %556, %557 : vector<2x128xi1>, vector<2x128xf32>
    %c0_i32_36 = arith.constant 0 : i32
    %559 = arith.cmpi eq, %arg2, %c0_i32_36 : i32
    %560 = arith.extui %559 : i1 to i32
    %c0_i32_37 = arith.constant 0 : i32
    %561 = arith.cmpi ne, %560, %c0_i32_37 : i32
    scf.if %561 {
      %cst_46 = arith.constant 0.000000e+00 : f32
      %566 = vector.broadcast %cst_46 : f32 to vector<1x1x2x128xf32>
      %c0_47 = arith.constant 0 : index
      %c0_48 = arith.constant 0 : index
      %c0_49 = arith.constant 0 : index
      %c0_50 = arith.constant 0 : index
      %567 = vector.load %arg14[%c0_47, %c0_48, %c0_49, %c0_50] : memref<1x1x2x128xf32, #tpu.memory_space<vmem>>, vector<1x1x2x128xf32>
      tpu.vector_store %arg14[%c0_47, %c0_48, %c0_49, %c0_50], %566 {strides = array<i32>} : memref<1x1x2x128xf32, #tpu.memory_space<vmem>>, vector<1x1x2x128xf32>,
    } else {
    }
    %c0_38 = arith.constant 0 : index
    %c0_39 = arith.constant 0 : index
    %c0_40 = arith.constant 0 : index
    %c0_41 = arith.constant 0 : index
    %562 = vector.load %arg14[%c0_38, %c0_39, %c0_40, %c0_41] : memref<1x1x2x128xf32, #tpu.memory_space<vmem>>, vector<1x1x2x128xf32>
    %563 = vector.shape_cast %558 : vector<2x128xf32> to vector<1x1x2x128xf32>
    %564 = arith.addf %562, %563 : vector<1x1x2x128xf32>
    %c0_42 = arith.constant 0 : index
    %c0_43 = arith.constant 0 : index
    %c0_44 = arith.constant 0 : index
    %c0_45 = arith.constant 0 : index
    %565 = vector.load %arg14[%c0_42, %c0_43, %c0_44, %c0_45] : memref<1x1x2x128xf32, #tpu.memory_space<vmem>>, vector<1x1x2x128xf32>
    tpu.vector_store %arg14[%c0_42, %c0_43, %c0_44, %c0_45], %564 {strides = array<i32>} : memref<1x1x2x128xf32, #tpu.memory_space<vmem>>, vector<1x1x2x128xf32>,
    return
  }
  func.func @transform_0(%arg0: i32, %arg1: i32, %arg2: i32) -> (i32, i32) {
    %c0_i32 = arith.constant 0 : i32
    %c0_i32_0 = arith.constant 0 : i32
    %c0_i32_1 = arith.constant 0 : i32
    return %c0_i32, %c0_i32_0 : i32, i32
  }
  func.func @transform_1(%arg0: i32, %arg1: i32, %arg2: i32) -> (i32, i32, i32) {
    %c1_i32 = arith.constant 1 : i32
    %0 = arith.muli %arg1, %c1_i32 : i32
    %1 = arith.addi %0, %arg2 : i32
    %c0_i32 = arith.constant 0 : i32
    %c0_i32_0 = arith.constant 0 : i32
    return %arg0, %c0_i32, %1 : i32, i32, i32
  }
  func.func @transform_2(%arg0: i32, %arg1: i32, %arg2: i32) -> (i32, i32, i32) {
    %c1_i32 = arith.constant 1 : i32
    %0 = arith.muli %arg1, %c1_i32 : i32
    %1 = arith.addi %0, %arg2 : i32
    %c0_i32 = arith.constant 0 : i32
    %c0_i32_0 = arith.constant 0 : i32
    return %arg0, %c0_i32, %1 : i32, i32, i32
  }
  func.func @transform_3(%arg0: i32, %arg1: i32, %arg2: i32) -> (i32, i32, i32) {
    %c1_i32 = arith.constant 1 : i32
    %0 = arith.muli %arg1, %c1_i32 : i32
    %1 = arith.addi %0, %arg2 : i32
    %c0_i32 = arith.constant 0 : i32
    %c0_i32_0 = arith.constant 0 : i32
    return %arg0, %c0_i32, %1 : i32, i32, i32
  }
  func.func @transform_4(%arg0: i32, %arg1: i32, %arg2: i32) -> (i32, i32) {
    %c0_i32 = arith.constant 0 : i32
    %c0_i32_0 = arith.constant 0 : i32
    %c0_i32_1 = arith.constant 0 : i32
    return %c0_i32, %c0_i32_0 : i32, i32
  }
  func.func @transform_5(%arg0: i32, %arg1: i32, %arg2: i32) -> (i32, i32, i32) {
    %c1_i32 = arith.constant 1 : i32
    %0 = arith.muli %arg1, %c1_i32 : i32
    %1 = arith.addi %0, %arg2 : i32
    %c0_i32 = arith.constant 0 : i32
    %c0_i32_0 = arith.constant 0 : i32
    return %arg0, %c0_i32, %1 : i32, i32, i32
  }
  func.func @transform_6(%arg0: i32, %arg1: i32, %arg2: i32) -> (i32, i32, i32) {
    %c1_i32 = arith.constant 1 : i32
    %0 = arith.muli %arg1, %c1_i32 : i32
    %1 = arith.addi %0, %arg2 : i32
    %c0_i32 = arith.constant 0 : i32
    %c0_i32_0 = arith.constant 0 : i32
    return %arg0, %c0_i32, %1 : i32, i32, i32
  }
  func.func @transform_7(%arg0: i32, %arg1: i32, %arg2: i32) -> (i32, i32, i32) {
    %c1_i32 = arith.constant 1 : i32
    %0 = arith.muli %arg1, %c1_i32 : i32
    %1 = arith.addi %0, %arg2 : i32
    %c0_i32 = arith.constant 0 : i32
    %c0_i32_0 = arith.constant 0 : i32
    return %arg0, %c0_i32, %1 : i32, i32, i32
  }
  func.func @transform_8(%arg0: i32, %arg1: i32, %arg2: i32) -> (i32, i32, i32) {
    %c1_i32 = arith.constant 1 : i32
    %0 = arith.muli %arg1, %c1_i32 : i32
    %1 = arith.addi %0, %arg2 : i32
    %c0_i32 = arith.constant 0 : i32
    %c0_i32_0 = arith.constant 0 : i32
    return %arg0, %c0_i32, %1 : i32, i32, i32
  }
  func.func @transform_9(%arg0: i32, %arg1: i32, %arg2: i32) -> (i32, i32, i32) {
    %c1_i32 = arith.constant 1 : i32
    %0 = arith.muli %arg1, %c1_i32 : i32
    %1 = arith.addi %0, %arg2 : i32
    %c0_i32 = arith.constant 0 : i32
    %c0_i32_0 = arith.constant 0 : i32
    return %arg0, %c0_i32, %1 : i32, i32, i32
  }
  func.func @transform_10(%arg0: i32, %arg1: i32, %arg2: i32) -> (i32, i32, i32) {
    %c1_i32 = arith.constant 1 : i32
    %0 = arith.muli %arg1, %c1_i32 : i32
    %1 = arith.addi %0, %arg2 : i32
    %c0_i32 = arith.constant 0 : i32
    %c0_i32_0 = arith.constant 0 : i32
    return %arg0, %c0_i32, %1 : i32, i32, i32
  }
  func.func @transform_11(%arg0: i32, %arg1: i32, %arg2: i32) -> (i32, i32, i32, i32) {
    %c0_i32 = arith.constant 0 : i32
    %c0_i32_0 = arith.constant 0 : i32
    %c0_i32_1 = arith.constant 0 : i32
    return %arg0, %arg1, %c0_i32, %c0_i32_0 : i32, i32, i32, i32
  }
}

</mosaic_0001>

<llo_original>
// kernel: _p_losses_impl.1
$region0: #{_p_losses_impl.1}
  #allocation0 [shape = 'u32[]', space=smem, size = 0x4, offset = 0x4, fixed_abs, tag = 'smem constant byte address 0x4 - core index']
  #allocation1 [shape = 'u32[144,128]{1,0:T(1,128)}', space=vmem, size = 0x12000, scoped, tag = 'internal scratch']
  %s0 = inlined_call_operand.vmem [shape: f32[6,2], index: 0, kind: input, shape index: {}]
  %s1 = inlined_call_operand.vmem [shape: f32[2,8,128], index: 1, kind: input, shape index: {}]
  %s2 = inlined_call_operand.vmem [shape: f32[2,8,128], index: 2, kind: input, shape index: {}]
  %s3 = inlined_call_operand.vmem [shape: f32[2,8,128], index: 3, kind: input, shape index: {}]
  %s4 = inlined_call_operand.vmem [shape: f32[8,128], index: 4, kind: input, shape index: {}]
  %s5 = inlined_call_operand.vmem [shape: bf16[2,8,128], index: 5, kind: output, shape index: {0}]
  %s6 = inlined_call_operand.vmem [shape: bf16[2,8,128], index: 6, kind: output, shape index: {1}]
  %s7 = inlined_call_operand.vmem [shape: bf16[2,8,128], index: 7, kind: output, shape index: {2}]
  %s8 = inlined_call_operand.vmem [shape: bf16[2,8,128], index: 8, kind: output, shape index: {3}]
  %s9 = inlined_call_operand.vmem [shape: bf16[2,8,128], index: 9, kind: output, shape index: {4}]
  %s10 = inlined_call_operand.vmem [shape: bf16[2,8,128], index: 10, kind: output, shape index: {5}]
  %s11 = inlined_call_operand.vmem [shape: f32[2,1,2,128], index: 11, kind: output, shape index: {6}]
  %12 = xla_tuple %s5, %s6, %s7, %s8, %s9, %s10, %s11
  %s13 = sld [smem:[#allocation0]]
  $region109: #{_p_losses_impl.1} parent=0
    _
  %s15 = ssub.s32 1, %s13
  %s16 = scalar_select 0, %s15, %s13
  $region1: #{_p_losses_impl.1} parent=0
    #allocation2 [shape = 'u8[4096]{0}', space=smem, size = 0x1000, scoped, tag = 'input window, operand 0, single buffered']
    #allocation3 [shape = 's32[2]{0}', space=sflag, size = 0x8, scoped, tag = 'scoped memory for _p_losses_impl.1']
    %17 = vsyncpa [#allocation3], 0
    loop: start=0, step=1, limit=4
    $region2: #{_p_losses_impl.1} parent=1 // loop_pre_header
      _
    $region3: #{_p_losses_impl.1} parent=1 // loop_header
      %s19 = sphi 0, %s23
      %p20 = scmp.ge.s32.totalorder %s19, 4
      %s26 = sphi 0, %s45
      %s27 = sphi 0, %s41
      %s28 = sphi 0, %s37
      %s29 = sphi 0, %s26
      %s30 = sphi 0, %s27
      %s31 = sphi 0, %s28
      %s32 = sphi 0, %s29
      %s33 = sphi 0, %s30
      %s34 = sphi 0, %s31
      %s46 = sphi 0, %s46
      %s48 = sphi 0, %s46
      %s49 = sphi 0, %s48
      %s63 = sphi 0, %s49
      %s73 = sphi 0, %s75
      %s76 = sphi 0, %s73
      %s77 = sphi 0, %s76
      %s93 = sphi 0, %s77
      %s103 = sphi 0, %s105
      %s106 = sphi 0, %s103
      %s107 = sphi 0, %s106
      %s123 = sphi 0, %s107
      %s133 = sphi 0, %s135
      %s136 = sphi 0, %s133
      %s137 = sphi 0, %s136
      %s153 = sphi 0, %s137
      %s157 = sphi 0, %s157
      %s159 = sphi 0, %s157
      %s160 = sphi 0, %s159
      %s174 = sphi 0, %s160
      %s184 = sphi 0, %s186
      %s187 = sphi 0, %s184
      %s188 = sphi 0, %s187
      %s204 = sphi 0, %s188
      %s214 = sphi 0, %s216
      %s217 = sphi 0, %s214
      %s218 = sphi 0, %s217
      %s234 = sphi 0, %s218
      %s244 = sphi 0, %s246
      %s247 = sphi 0, %s244
      %s248 = sphi 0, %s247
      %s264 = sphi 0, %s248
      %s274 = sphi 0, %s276
      %s277 = sphi 0, %s274
      %s278 = sphi 0, %s277
      %s294 = sphi 0, %s278
      %s304 = sphi 0, %s306
      %s307 = sphi 0, %s304
      %s308 = sphi 0, %s307
      %s324 = sphi 0, %s308
      %s334 = sphi 0, %s336
      %s337 = sphi 0, %s334
      %s338 = sphi 0, %s337
      %s354 = sphi 0, %s338
      %s362 = sphi 0, %s364
      %s365 = sphi 0, %s362
      %s366 = sphi 0, %s365
      %s382 = sphi 0, %s366
    $region4: #{_p_losses_impl.1} parent=1 // loop_header_branch
      %22 = sbr.rel (%p20) target = $region8
    $region5: #{_p_losses_impl.1} parent=1 // loop_body
      %s24 = ssub.s32 %s19, 1
      %s25 = ssub.s32 %s19, 2
      %s35 = sadd.s32 1, %s28
      %p36 = scmp.ge.s32.totalorder %s35, 1
      %s37 = scalar_select %p36, 0, %s35
      %s38 = sadd.s32 1, %s27
      %s39 = scalar_select %p36, %s38, %s27
      %p40 = scmp.ge.s32.totalorder %s39, 1
      %s41 = scalar_select %p40, 0, %s39
      %s42 = sadd.s32 1, %s26
      %s43 = scalar_select %p40, %s42, %s26
      %p44 = scmp.ge.s32.totalorder %s43, 2
      %s45 = scalar_select %p44, 0, %s43
      %s47 = sadd.s32 %s46, 1
      %p50 = scmp.eq.s32.totalorder %s19, 1
      %p51 = scmp.ne.s32.totalorder %s46, %s48
      %p52 = scmp.eq.s32.totalorder %s19, 0
      %p53 = por %p51, %p52
      %p54 = scmp.ne.s32.totalorder %s46, %s48
      %p55 = scmp.eq.s32.totalorder %s24, 1
      %p56 = por %p54, %p55
      %p57 = scmp.ne.s32.totalorder %s48, %s49
      %p58 = scmp.eq.s32.totalorder %s24, 0
      %p59 = por %p57, %p58
      %p60 = scmp.ne.s32.totalorder %s48, %s49
      %p61 = scmp.eq.s32.totalorder %s25, 1
      %p62 = por %p60, %p61
      %p64 = scmp.ne.s32.totalorder %s49, %s63
      %p65 = scmp.eq.s32.totalorder %s25, 0
      %p66 = por %p64, %p65
      %s67 = sadd.s32 %s27, %s28
      %s68 = sadd.s32 %s41, %s37
      %s69 = ssub.s32 %s26, %s45
      %s70 = ssub.s32 %s67, %s68
      %s71 = sor.u32 %s69, %s70
      %p72 = scmp.eq.s32.totalorder %s71, 0
      %s74 = sadd.s32 %s73, 1
      %s75 = scalar_select %p72, %s73, %s74
      %p78 = pneg %p72
      %p79 = scmp.eq.s32.totalorder %s19, 1
      %p80 = por %p78, %p79
      %p81 = scmp.ne.s32.totalorder %s73, %s76
      %p82 = scmp.eq.s32.totalorder %s19, 0
      %p83 = por %p81, %p82
      %p84 = scmp.ne.s32.totalorder %s73, %s76
      %p85 = scmp.eq.s32.totalorder %s24, 1
      %p86 = por %p84, %p85
      %p87 = scmp.ne.s32.totalorder %s76, %s77
      %p88 = scmp.eq.s32.totalorder %s24, 0
      %p89 = por %p87, %p88
      %p90 = scmp.ne.s32.totalorder %s76, %s77
      %p91 = scmp.eq.s32.totalorder %s25, 1
      %p92 = por %p90, %p91
      %p94 = scmp.ne.s32.totalorder %s77, %s93
      %p95 = scmp.eq.s32.totalorder %s25, 0
      %p96 = por %p94, %p95
      %s97 = sadd.s32 %s27, %s28
      %s98 = sadd.s32 %s41, %s37
      %s99 = ssub.s32 %s26, %s45
      %s100 = ssub.s32 %s97, %s98
      %s101 = sor.u32 %s99, %s100
      %p102 = scmp.eq.s32.totalorder %s101, 0
      %s104 = sadd.s32 %s103, 1
      %s105 = scalar_select %p102, %s103, %s104
      %p108 = pneg %p102
      %p109 = scmp.eq.s32.totalorder %s19, 1
      %p110 = por %p108, %p109
      %p111 = scmp.ne.s32.totalorder %s103, %s106
      %p112 = scmp.eq.s32.totalorder %s19, 0
      %p113 = por %p111, %p112
      %p114 = scmp.ne.s32.totalorder %s103, %s106
      %p115 = scmp.eq.s32.totalorder %s24, 1
      %p116 = por %p114, %p115
      %p117 = scmp.ne.s32.totalorder %s106, %s107
      %p118 = scmp.eq.s32.totalorder %s24, 0
      %p119 = por %p117, %p118
      %p120 = scmp.ne.s32.totalorder %s106, %s107
      %p121 = scmp.eq.s32.totalorder %s25, 1
      %p122 = por %p120, %p121
      %p124 = scmp.ne.s32.totalorder %s107, %s123
      %p125 = scmp.eq.s32.totalorder %s25, 0
      %p126 = por %p124, %p125
      %s127 = sadd.s32 %s27, %s28
      %s128 = sadd.s32 %s41, %s37
      %s129 = ssub.s32 %s26, %s45
      %s130 = ssub.s32 %s127, %s128
      %s131 = sor.u32 %s129, %s130
      %p132 = scmp.eq.s32.totalorder %s131, 0
      %s134 = sadd.s32 %s133, 1
      %s135 = scalar_select %p132, %s133, %s134
      %p138 = pneg %p132
      %p139 = scmp.eq.s32.totalorder %s19, 1
      %p140 = por %p138, %p139
      %p141 = scmp.ne.s32.totalorder %s133, %s136
      %p142 = scmp.eq.s32.totalorder %s19, 0
      %p143 = por %p141, %p142
      %p144 = scmp.ne.s32.totalorder %s133, %s136
      %p145 = scmp.eq.s32.totalorder %s24, 1
      %p146 = por %p144, %p145
      %p147 = scmp.ne.s32.totalorder %s136, %s137
      %p148 = scmp.eq.s32.totalorder %s24, 0
      %p149 = por %p147, %p148
      %p150 = scmp.ne.s32.totalorder %s136, %s137
      %p151 = scmp.eq.s32.totalorder %s25, 1
      %p152 = por %p150, %p151
      %p154 = scmp.ne.s32.totalorder %s137, %s153
      %p155 = scmp.eq.s32.totalorder %s25, 0
      %p156 = por %p154, %p155
      %s158 = sadd.s32 %s157, 1
      %p161 = scmp.eq.s32.totalorder %s19, 1
      %p162 = scmp.ne.s32.totalorder %s157, %s159
      %p163 = scmp.eq.s32.totalorder %s19, 0
      %p164 = por %p162, %p163
      %p165 = scmp.ne.s32.totalorder %s157, %s159
      %p166 = scmp.eq.s32.totalorder %s24, 1
      %p167 = por %p165, %p166
      %p168 = scmp.ne.s32.totalorder %s159, %s160
      %p169 = scmp.eq.s32.totalorder %s24, 0
      %p170 = por %p168, %p169
      %p171 = scmp.ne.s32.totalorder %s159, %s160
      %p172 = scmp.eq.s32.totalorder %s25, 1
      %p173 = por %p171, %p172
      %p175 = scmp.ne.s32.totalorder %s160, %s174
      %p176 = scmp.eq.s32.totalorder %s25, 0
      %p177 = por %p175, %p176
      %s178 = sadd.s32 %s27, %s28
      %s179 = sadd.s32 %s41, %s37
      %s180 = ssub.s32 %s26, %s45
      %s181 = ssub.s32 %s178, %s179
      %s182 = sor.u32 %s180, %s181
      %p183 = scmp.eq.s32.totalorder %s182, 0
      %s185 = sadd.s32 %s184, 1
      %s186 = scalar_select %p183, %s184, %s185
      %p189 = pneg %p183
      %p190 = scmp.eq.s32.totalorder %s19, 1
      %p191 = por %p189, %p190
      %p192 = scmp.ne.s32.totalorder %s184, %s187
      %p193 = scmp.eq.s32.totalorder %s19, 0
      %p194 = por %p192, %p193
      %p195 = scmp.ne.s32.totalorder %s184, %s187
      %p196 = scmp.eq.s32.totalorder %s24, 1
      %p197 = por %p195, %p196
      %p198 = scmp.ne.s32.totalorder %s187, %s188
      %p199 = scmp.eq.s32.totalorder %s24, 0
      %p200 = por %p198, %p199
      %p201 = scmp.ne.s32.totalorder %s187, %s188
      %p202 = scmp.eq.s32.totalorder %s25, 1
      %p203 = por %p201, %p202
      %p205 = scmp.ne.s32.totalorder %s188, %s204
      %p206 = scmp.eq.s32.totalorder %s25, 0
      %p207 = por %p205, %p206
      %s208 = sadd.s32 %s27, %s28
      %s209 = sadd.s32 %s41, %s37
      %s210 = ssub.s32 %s26, %s45
      %s211 = ssub.s32 %s208, %s209
      %s212 = sor.u32 %s210, %s211
      %p213 = scmp.eq.s32.totalorder %s212, 0
      %s215 = sadd.s32 %s214, 1
      %s216 = scalar_select %p213, %s214, %s215
      %p219 = pneg %p213
      %p220 = scmp.eq.s32.totalorder %s19, 1
      %p221 = por %p219, %p220
      %p222 = scmp.ne.s32.totalorder %s214, %s217
      %p223 = scmp.eq.s32.totalorder %s19, 0
      %p224 = por %p222, %p223
      %p225 = scmp.ne.s32.totalorder %s214, %s217
      %p226 = scmp.eq.s32.totalorder %s24, 1
      %p227 = por %p225, %p226
      %p228 = scmp.ne.s32.totalorder %s217, %s218
      %p229 = scmp.eq.s32.totalorder %s24, 0
      %p230 = por %p228, %p229
      %p231 = scmp.ne.s32.totalorder %s217, %s218
      %p232 = scmp.eq.s32.totalorder %s25, 1
      %p233 = por %p231, %p232
      %p235 = scmp.ne.s32.totalorder %s218, %s234
      %p236 = scmp.eq.s32.totalorder %s25, 0
      %p237 = por %p235, %p236
      %s238 = sadd.s32 %s27, %s28
      %s239 = sadd.s32 %s41, %s37
      %s240 = ssub.s32 %s26, %s45
      %s241 = ssub.s32 %s238, %s239
      %s242 = sor.u32 %s240, %s241
      %p243 = scmp.eq.s32.totalorder %s242, 0
      %s245 = sadd.s32 %s244, 1
      %s246 = scalar_select %p243, %s244, %s245
      %p249 = pneg %p243
      %p250 = scmp.eq.s32.totalorder %s19, 1
      %p251 = por %p249, %p250
      %p252 = scmp.ne.s32.totalorder %s244, %s247
      %p253 = scmp.eq.s32.totalorder %s19, 0
      %p254 = por %p252, %p253
      %p255 = scmp.ne.s32.totalorder %s244, %s247
      %p256 = scmp.eq.s32.totalorder %s24, 1
      %p257 = por %p255, %p256
      %p258 = scmp.ne.s32.totalorder %s247, %s248
      %p259 = scmp.eq.s32.totalorder %s24, 0
      %p260 = por %p258, %p259
      %p261 = scmp.ne.s32.totalorder %s247, %s248
      %p262 = scmp.eq.s32.totalorder %s25, 1
      %p263 = por %p261, %p262
      %p265 = scmp.ne.s32.totalorder %s248, %s264
      %p266 = scmp.eq.s32.totalorder %s25, 0
      %p267 = por %p265, %p266
      %s268 = sadd.s32 %s27, %s28
      %s269 = sadd.s32 %s41, %s37
      %s270 = ssub.s32 %s26, %s45
      %s271 = ssub.s32 %s268, %s269
      %s272 = sor.u32 %s270, %s271
      %p273 = scmp.eq.s32.totalorder %s272, 0
      %s275 = sadd.s32 %s274, 1
      %s276 = scalar_select %p273, %s274, %s275
      %p279 = pneg %p273
      %p280 = scmp.eq.s32.totalorder %s19, 1
      %p281 = por %p279, %p280
      %p282 = scmp.ne.s32.totalorder %s274, %s277
      %p283 = scmp.eq.s32.totalorder %s19, 0
      %p284 = por %p282, %p283
      %p285 = scmp.ne.s32.totalorder %s274, %s277
      %p286 = scmp.eq.s32.totalorder %s24, 1
      %p287 = por %p285, %p286
      %p288 = scmp.ne.s32.totalorder %s277, %s278
      %p289 = scmp.eq.s32.totalorder %s24, 0
      %p290 = por %p288, %p289
      %p291 = scmp.ne.s32.totalorder %s277, %s278
      %p292 = scmp.eq.s32.totalorder %s25, 1
      %p293 = por %p291, %p292
      %p295 = scmp.ne.s32.totalorder %s278, %s294
      %p296 = scmp.eq.s32.totalorder %s25, 0
      %p297 = por %p295, %p296
      %s298 = sadd.s32 %s27, %s28
      %s299 = sadd.s32 %s41, %s37
      %s300 = ssub.s32 %s26, %s45
      %s301 = ssub.s32 %s298, %s299
      %s302 = sor.u32 %s300, %s301
      %p303 = scmp.eq.s32.totalorder %s302, 0
      %s305 = sadd.s32 %s304, 1
      %s306 = scalar_select %p303, %s304, %s305
      %p309 = pneg %p303
      %p310 = scmp.eq.s32.totalorder %s19, 1
      %p311 = por %p309, %p310
      %p312 = scmp.ne.s32.totalorder %s304, %s307
      %p313 = scmp.eq.s32.totalorder %s19, 0
      %p314 = por %p312, %p313
      %p315 = scmp.ne.s32.totalorder %s304, %s307
      %p316 = scmp.eq.s32.totalorder %s24, 1
      %p317 = por %p315, %p316
      %p318 = scmp.ne.s32.totalorder %s307, %s308
      %p319 = scmp.eq.s32.totalorder %s24, 0
      %p320 = por %p318, %p319
      %p321 = scmp.ne.s32.totalorder %s307, %s308
      %p322 = scmp.eq.s32.totalorder %s25, 1
      %p323 = por %p321, %p322
      %p325 = scmp.ne.s32.totalorder %s308, %s324
      %p326 = scmp.eq.s32.totalorder %s25, 0
      %p327 = por %p325, %p326
      %s328 = sadd.s32 %s27, %s28
      %s329 = sadd.s32 %s41, %s37
      %s330 = ssub.s32 %s26, %s45
      %s331 = ssub.s32 %s328, %s329
      %s332 = sor.u32 %s330, %s331
      %p333 = scmp.eq.s32.totalorder %s332, 0
      %s335 = sadd.s32 %s334, 1
      %s336 = scalar_select %p333, %s334, %s335
      %p339 = pneg %p333
      %p340 = scmp.eq.s32.totalorder %s19, 1
      %p341 = por %p339, %p340
      %p342 = scmp.ne.s32.totalorder %s334, %s337
      %p343 = scmp.eq.s32.totalorder %s19, 0
      %p344 = por %p342, %p343
      %p345 = scmp.ne.s32.totalorder %s334, %s337
      %p346 = scmp.eq.s32.totalorder %s24, 1
      %p347 = por %p345, %p346
      %p348 = scmp.ne.s32.totalorder %s337, %s338
      %p349 = scmp.eq.s32.totalorder %s24, 0
      %p350 = por %p348, %p349
      %p351 = scmp.ne.s32.totalorder %s337, %s338
      %p352 = scmp.eq.s32.totalorder %s25, 1
      %p353 = por %p351, %p352
      %p355 = scmp.ne.s32.totalorder %s338, %s354
      %p356 = scmp.eq.s32.totalorder %s25, 0
      %p357 = por %p355, %p356
      %s358 = ssub.s32 %s26, %s45
      %s359 = ssub.s32 %s27, %s41
      %s360 = sor.u32 %s358, %s359
      %p361 = scmp.eq.s32.totalorder %s360, 0
      %s363 = sadd.s32 %s362, 1
      %s364 = scalar_select %p361, %s362, %s363
      %p367 = pneg %p361
      %p368 = scmp.eq.s32.totalorder %s19, 1
      %p369 = por %p367, %p368
      %p370 = scmp.ne.s32.totalorder %s362, %s365
      %p371 = scmp.eq.s32.totalorder %s19, 0
      %p372 = por %p370, %p371
      %p373 = scmp.ne.s32.totalorder %s362, %s365
      %p374 = scmp.eq.s32.totalorder %s24, 1
      %p375 = por %p373, %p374
      %p376 = scmp.ne.s32.totalorder %s365, %s366
      %p377 = scmp.eq.s32.totalorder %s24, 0
      %p378 = por %p376, %p377
      %p379 = scmp.ne.s32.totalorder %s365, %s366
      %p380 = scmp.eq.s32.totalorder %s25, 1
      %p381 = por %p379, %p380
      %p383 = scmp.ne.s32.totalorder %s366, %s382
      %p384 = scmp.eq.s32.totalorder %s25, 0
      %p385 = por %p383, %p384
      %p386 = scmp.le.s32.totalorder 1, %s19
      %p387 = scmp.lt.s32.totalorder %s19, 3
      %p388 = pnand %p386, %p387
      %p389 = pneg %p388
      // Predicated region
      $region9: #{_p_losses_impl.1} parent=5 // pred_check
        _
      $region10: #{_p_losses_impl.1} parent=5 // pred_check_branch
        %391 = sbr.rel (%p388) target = $region12
      $region11: #{_p_losses_impl.1} parent=5 // pred_region
        %s392 = ssub.s32 %s19, 1
        // Predicated region
        $region13: #{_p_losses_impl.1} parent=11 // pred_check
          %p393 = pneg %p59
        $region14: #{_p_losses_impl.1} parent=11 // pred_check_branch
          %395 = sbr.rel (%p393) target = $region16
        $region15: #{_p_losses_impl.1} parent=11 // pred_region
          %s397 = ssub.s32 128, 128
          %398 = vsyncadd [#allocation3], %s397
          %s400 = sshll.u32 %s0, 4
          %s401 = int_to_ptr.vmem [resolvable:$true] %s400
          %403 = dma.vmem_to_smem %s401, 128, [#allocation2], [#allocation3]
        $region16: #{_p_losses_impl.1} parent=11 // pred_fallthru
          _
        // Predicated region
        $region17: #{_p_losses_impl.1} parent=11 // pred_check
          %p404 = pneg %p170
        $region18: #{_p_losses_impl.1} parent=11 // pred_check_branch
          %406 = sbr.rel (%p404) target = $region20
        $region19: #{_p_losses_impl.1} parent=11 // pred_region
          _
        $region20: #{_p_losses_impl.1} parent=11 // pred_fallthru
          _
      $region12: #{_p_losses_impl.1} parent=5 // pred_fallthru
        _
      %p407 = scmp.lt.s32.totalorder %s19, 2
      // Predicated region
      $region21: #{_p_losses_impl.1} parent=5 // pred_check
        %p408 = pneg %p407
      $region22: #{_p_losses_impl.1} parent=5 // pred_check_branch
        %410 = sbr.rel (%p408) target = $region24
      $region23: #{_p_losses_impl.1} parent=5 // pred_region
        // Predicated region
        $region25: #{_p_losses_impl.1} parent=23 // pred_check
          %p411 = pneg %p83
        $region26: #{_p_losses_impl.1} parent=23 // pred_check_branch
          %413 = sbr.rel (%p411) target = $region28
        $region27: #{_p_losses_impl.1} parent=23 // pred_region
          %s414 = sadd.s32 %s27, %s28
          %p415 = scmp.lt.s32.totalorder %s26, 1
          %s416 = scalar_select %p415, %s26, 1
          %p417 = scmp.lt.s32.totalorder %s414, 0
          %s418 = scalar_select %p417, %s414, 0
          %s419 = sadd.s32 %s418, %s416
          %s420 = smul.addr %s419, 8
          %s421 = scalar_lea.vmem %s1, %s420
          %s422 = sadd.s32 %s27, %s28
        $region28: #{_p_losses_impl.1} parent=23 // pred_fallthru
          _
        // Predicated region
        $region29: #{_p_losses_impl.1} parent=23 // pred_check
          %p423 = pneg %p113
        $region30: #{_p_losses_impl.1} parent=23 // pred_check_branch
          %425 = sbr.rel (%p423) target = $region32
        $region31: #{_p_losses_impl.1} parent=23 // pred_region
          %s426 = sadd.s32 %s27, %s28
          %p427 = scmp.lt.s32.totalorder %s26, 1
          %s428 = scalar_select %p427, %s26, 1
          %p429 = scmp.lt.s32.totalorder %s426, 0
          %s430 = scalar_select %p429, %s426, 0
          %s431 = sadd.s32 %s430, %s428
          %s432 = smul.addr %s431, 8
          %s433 = scalar_lea.vmem %s2, %s432
          %s434 = sadd.s32 %s27, %s28
        $region32: #{_p_losses_impl.1} parent=23 // pred_fallthru
          _
        // Predicated region
        $region33: #{_p_losses_impl.1} parent=23 // pred_check
          %p435 = pneg %p143
        $region34: #{_p_losses_impl.1} parent=23 // pred_check_branch
          %437 = sbr.rel (%p435) target = $region36
        $region35: #{_p_losses_impl.1} parent=23 // pred_region
          %s438 = sadd.s32 %s27, %s28
          %p439 = scmp.lt.s32.totalorder %s26, 1
          %s440 = scalar_select %p439, %s26, 1
          %p441 = scmp.lt.s32.totalorder %s438, 0
          %s442 = scalar_select %p441, %s438, 0
          %s443 = sadd.s32 %s442, %s440
          %s444 = smul.addr %s443, 8
          %s445 = scalar_lea.vmem %s3, %s444
          %s446 = sadd.s32 %s27, %s28
        $region36: #{_p_losses_impl.1} parent=23 // pred_fallthru
          _
      $region24: #{_p_losses_impl.1} parent=5 // pred_fallthru
        _
      %p447 = scmp.le.s32.totalorder 1, %s19
      %p448 = scmp.lt.s32.totalorder %s19, 3
      %p449 = pnand %p447, %p448
      %p450 = pneg %p449
      // Predicated region
      $region37: #{_p_losses_impl.1} parent=5 // pred_check
        _
      $region38: #{_p_losses_impl.1} parent=5 // pred_check_branch
        %452 = sbr.rel (%p449) target = $region40
      $region39: #{_p_losses_impl.1} parent=5 // pred_region
        %s453 = ssub.s32 %s19, 1
        // Predicated region
        $region41: #{_p_losses_impl.1} parent=39 // pred_check
          %p454 = pneg %p59
        $region42: #{_p_losses_impl.1} parent=39 // pred_check_branch
          %456 = sbr.rel (%p454) target = $region44
        $region43: #{_p_losses_impl.1} parent=39 // pred_region
          %457 = dma.done [#allocation3], 128
        $region44: #{_p_losses_impl.1} parent=39 // pred_fallthru
          _
        %458 = sfence
        %p459 = pneg %p59
        %p460 = pneg %p56
        %s461 = sadd.s32 %s30, %s31
        %p462 = scmp.lt.s32.totalorder %s29, 1
        %s463 = scalar_select %p462, %s29, 1
        %p464 = scmp.lt.s32.totalorder %s461, 0
        %s465 = scalar_select %p464, %s461, 0
        %s466 = sadd.s32 %s465, %s463
        %s467 = smul.addr %s466, 8
        %s468 = scalar_lea.vmem %s1, %s467
        %p469 = pneg %p89
        %p470 = pneg %p86
        %s471 = sadd.s32 %s30, %s31
        %p472 = scmp.lt.s32.totalorder %s29, 1
        %s473 = scalar_select %p472, %s29, 1
        %p474 = scmp.lt.s32.totalorder %s471, 0
        %s475 = scalar_select %p474, %s471, 0
        %s476 = sadd.s32 %s475, %s473
        %s477 = smul.addr %s476, 8
        %s478 = scalar_lea.vmem %s2, %s477
        %p479 = pneg %p119
        %p480 = pneg %p116
        %s481 = sadd.s32 %s30, %s31
        %p482 = scmp.lt.s32.totalorder %s29, 1
        %s483 = scalar_select %p482, %s29, 1
        %p484 = scmp.lt.s32.totalorder %s481, 0
        %s485 = scalar_select %p484, %s481, 0
        %s486 = sadd.s32 %s485, %s483
        %s487 = smul.addr %s486, 8
        %s488 = scalar_lea.vmem %s3, %s487
        %p489 = pneg %p149
        %p490 = pneg %p146
        %p491 = pneg %p170
        %p492 = pneg %p167
        %p493 = pneg %p200
        %p494 = pneg %p197
        %s495 = sadd.s32 %s30, %s31
        %p496 = scmp.lt.s32.totalorder %s29, 1
        %s497 = scalar_select %p496, %s29, 1
        %p498 = scmp.lt.s32.totalorder %s495, 0
        %s499 = scalar_select %p498, %s495, 0
        %s500 = sadd.s32 %s499, %s497
        %s501 = smul.addr %s500, 4
        %s502 = scalar_lea.vmem %s5, %s501
        %p503 = pneg %p230
        %p504 = pneg %p227
        %s505 = sadd.s32 %s30, %s31
        %p506 = scmp.lt.s32.totalorder %s29, 1
        %s507 = scalar_select %p506, %s29, 1
        %p508 = scmp.lt.s32.totalorder %s505, 0
        %s509 = scalar_select %p508, %s505, 0
        %s510 = sadd.s32 %s509, %s507
        %s511 = smul.addr %s510, 4
        %s512 = scalar_lea.vmem %s6, %s511
        %p513 = pneg %p260
        %p514 = pneg %p257
        %s515 = sadd.s32 %s30, %s31
        %p516 = scmp.lt.s32.totalorder %s29, 1
        %s517 = scalar_select %p516, %s29, 1
        %p518 = scmp.lt.s32.totalorder %s515, 0
        %s519 = scalar_select %p518, %s515, 0
        %s520 = sadd.s32 %s519, %s517
        %s521 = smul.addr %s520, 4
        %s522 = scalar_lea.vmem %s7, %s521
        %p523 = pneg %p290
        %p524 = pneg %p287
        %s525 = sadd.s32 %s30, %s31
        %p526 = scmp.lt.s32.totalorder %s29, 1
        %s527 = scalar_select %p526, %s29, 1
        %p528 = scmp.lt.s32.totalorder %s525, 0
        %s529 = scalar_select %p528, %s525, 0
        %s530 = sadd.s32 %s529, %s527
        %s531 = smul.addr %s530, 4
        %s532 = scalar_lea.vmem %s8, %s531
        %p533 = pneg %p320
        %p534 = pneg %p317
        %s535 = sadd.s32 %s30, %s31
        %p536 = scmp.lt.s32.totalorder %s29, 1
        %s537 = scalar_select %p536, %s29, 1
        %p538 = scmp.lt.s32.totalorder %s535, 0
        %s539 = scalar_select %p538, %s535, 0
        %s540 = sadd.s32 %s539, %s537
        %s541 = smul.addr %s540, 4
        %s542 = scalar_lea.vmem %s9, %s541
        %p543 = pneg %p350
        %p544 = pneg %p347
        %s545 = sadd.s32 %s30, %s31
        %p546 = scmp.lt.s32.totalorder %s29, 1
        %s547 = scalar_select %p546, %s29, 1
        %p548 = scmp.lt.s32.totalorder %s545, 0
        %s549 = scalar_select %p548, %s545, 0
        %s550 = sadd.s32 %s549, %s547
        %s551 = smul.addr %s550, 4
        %s552 = scalar_lea.vmem %s10, %s551
        %p553 = pneg %p378
        %p554 = pneg %p375
        %p555 = scmp.lt.s32.totalorder %s29, 1
        %s556 = scalar_select %p555, %s29, 1
        %p557 = scmp.lt.s32.totalorder %s30, 0
        %s558 = scalar_select %p557, %s30, 0
        %s559 = sadd.s32 %s558, %s556
        %s560 = smul.addr %s559, 2
        %s561 = scalar_lea.vmem %s11, %s560
        %s562 = sadd.s32 %s30, %s31
        %p563 = scmp.lt.s32.totalorder %s29, 1
        %s564 = scalar_select %p563, %s29, 1
        %p565 = scmp.lt.s32.totalorder %s562, 0
        %s566 = scalar_select %p565, %s562, 0
        %s567 = sadd.s32 %s566, %s564
        %s568 = smul.addr %s567, 8
        %s569 = scalar_lea.vmem %s1, %s568
        %s570 = sadd.s32 %s30, %s31
        %s571 = sadd.s32 %s30, %s31
        %p572 = scmp.lt.s32.totalorder %s29, 1
        %s573 = scalar_select %p572, %s29, 1
        %p574 = scmp.lt.s32.totalorder %s571, 0
        %s575 = scalar_select %p574, %s571, 0
        %s576 = sadd.s32 %s575, %s573
        %s577 = smul.addr %s576, 8
        %s578 = scalar_lea.vmem %s2, %s577
        %s579 = sadd.s32 %s30, %s31
        %s580 = sadd.s32 %s30, %s31
        %p581 = scmp.lt.s32.totalorder %s29, 1
        %s582 = scalar_select %p581, %s29, 1
        %p583 = scmp.lt.s32.totalorder %s580, 0
        %s584 = scalar_select %p583, %s580, 0
        %s585 = sadd.s32 %s584, %s582
        %s586 = smul.addr %s585, 8
        %s587 = scalar_lea.vmem %s3, %s586
        %s588 = sadd.s32 %s30, %s31
        %s589 = sadd.s32 %s30, %s31
        %p590 = scmp.lt.s32.totalorder %s29, 1
        %s591 = scalar_select %p590, %s29, 1
        %p592 = scmp.lt.s32.totalorder %s589, 0
        %s593 = scalar_select %p592, %s589, 0
        %s594 = sadd.s32 %s593, %s591
        %s595 = smul.addr %s594, 4
        %s596 = scalar_lea.vmem %s5, %s595
        %s597 = sadd.s32 %s30, %s31
        %s598 = sadd.s32 %s30, %s31
        %p599 = scmp.lt.s32.totalorder %s29, 1
        %s600 = scalar_select %p599, %s29, 1
        %p601 = scmp.lt.s32.totalorder %s598, 0
        %s602 = scalar_select %p601, %s598, 0
        %s603 = sadd.s32 %s602, %s600
        %s604 = smul.addr %s603, 4
        %s605 = scalar_lea.vmem %s6, %s604
        %s606 = sadd.s32 %s30, %s31
        %s607 = sadd.s32 %s30, %s31
        %p608 = scmp.lt.s32.totalorder %s29, 1
        %s609 = scalar_select %p608, %s29, 1
        %p610 = scmp.lt.s32.totalorder %s607, 0
        %s611 = scalar_select %p610, %s607, 0
        %s612 = sadd.s32 %s611, %s609
        %s613 = smul.addr %s612, 4
        %s614 = scalar_lea.vmem %s7, %s613
        %s615 = sadd.s32 %s30, %s31
        %s616 = sadd.s32 %s30, %s31
        %p617 = scmp.lt.s32.totalorder %s29, 1
        %s618 = scalar_select %p617, %s29, 1
        %p619 = scmp.lt.s32.totalorder %s616, 0
        %s620 = scalar_select %p619, %s616, 0
        %s621 = sadd.s32 %s620, %s618
        %s622 = smul.addr %s621, 4
        %s623 = scalar_lea.vmem %s8, %s622
        %s624 = sadd.s32 %s30, %s31
        %s625 = sadd.s32 %s30, %s31
        %p626 = scmp.lt.s32.totalorder %s29, 1
        %s627 = scalar_select %p626, %s29, 1
        %p628 = scmp.lt.s32.totalorder %s625, 0
        %s629 = scalar_select %p628, %s625, 0
        %s630 = sadd.s32 %s629, %s627
        %s631 = smul.addr %s630, 4
        %s632 = scalar_lea.vmem %s9, %s631
        %s633 = sadd.s32 %s30, %s31
        %s634 = sadd.s32 %s30, %s31
        %p635 = scmp.lt.s32.totalorder %s29, 1
        %s636 = scalar_select %p635, %s29, 1
        %p637 = scmp.lt.s32.totalorder %s634, 0
        %s638 = scalar_select %p637, %s634, 0
        %s639 = sadd.s32 %s638, %s636
        %s640 = smul.addr %s639, 4
        %s641 = scalar_lea.vmem %s10, %s640
        %s642 = sadd.s32 %s30, %s31
        %p643 = scmp.lt.s32.totalorder %s29, 1
        %s644 = scalar_select %p643, %s29, 1
        %p645 = scmp.lt.s32.totalorder %s30, 0
        %s646 = scalar_select %p645, %s30, 0
        %s647 = sadd.s32 %s646, %s644
        %s648 = smul.addr %s647, 2
        %s649 = scalar_lea.vmem %s11, %s648
        %s650 = sld [smem:[#allocation2 + %s29]]
        %s651 = sshra.s32 %s29, 7
        %s652 = sand.u32 %s29, 127
        %s653 = sadd.s32 %s651, 1
        %s654 = smul.u32 %s653, 128
        %s655 = sshra.s32 %s29, 7
        %s656 = sand.u32 %s29, 127
        %s657 = sadd.s32 %s654, %s656
        %s658 = sld [smem:[#allocation2 + %s657]]
        %s659 = sadd.s32 %s651, 2
        %s660 = smul.u32 %s659, 128
        %s661 = sadd.s32 %s660, %s656
        %s662 = sld [smem:[#allocation2 + %s661]]
        %s663 = sadd.s32 %s651, 3
        %s664 = smul.u32 %s663, 128
        %s665 = sadd.s32 %s664, %s656
        %s666 = sld [smem:[#allocation2 + %s665]]
        %s667 = sadd.s32 %s651, 4
        %s668 = smul.u32 %s667, 128
        %s669 = sadd.s32 %s668, %s656
        %s670 = sld [smem:[#allocation2 + %s669]]
        %s671 = sadd.s32 %s651, 5
        %s672 = smul.u32 %s671, 128
        %s673 = sadd.s32 %s672, %s656
        %s674 = sld [smem:[#allocation2 + %s673]]
        %v675 = vld [vmem:[%s569] sm:$0xff]
        %v676 = vld [vmem:[%s578] sm:$0xff]
        %v677 = vld [vmem:[%s587] sm:$0xff]
        %v678 = vld [vmem:[%s4] sm:$0xff]
        %v679 = vstv %s650
        %v680 = vmul.f32 %v679, %v675
        %v681 = vstv %s658
        %v682 = vmul.f32 %v681, %v676
        %v683 = vadd.f32 %v680, %v682
        %685 = vset.pattern.permute.xlu0 0
        %686 = vperm.xlu0 %685, %v678
        %v687 = vpop.permute.xlu0 %686
        %v689 = vlaneseq
        %v690 = vshrl.u32 %v689, 7
        %v691 = vsub.s32 0, %v690
        %v692 = vrot.slane %v683, %v691
        %v693 = vmul.f32 %v687, %v692
        %694 = vset.pattern.permute.xlu0 1
        %695 = vperm.xlu0 %694, %v678
        %v696 = vpop.permute.xlu0 %695
        %v698 = vlaneseq
        %v699 = vshrl.u32 %v698, 7
        %v700 = vsub.s32 1, %v699
        %v701 = vrot.slane %v683, %v700
        %v702 = vmul.f32 %v696, %v701
        %v703 = vadd.f32 %v693, %v702
        %704 = vset.pattern.permute.xlu0 2
        %705 = vperm.xlu0 %704, %v678
        %v706 = vpop.permute.xlu0 %705
        %v708 = vlaneseq
        %v709 = vshrl.u32 %v708, 7
        %v710 = vsub.s32 2, %v709
        %v711 = vrot.slane %v683, %v710
        %v712 = vmul.f32 %v706, %v711
        %v713 = vadd.f32 %v703, %v712
        %714 = vset.pattern.permute.xlu0 3
        %715 = vperm.xlu0 %714, %v678
        %v716 = vpop.permute.xlu0 %715
        %v718 = vlaneseq
        %v719 = vshrl.u32 %v718, 7
        %v720 = vsub.s32 3, %v719
        %v721 = vrot.slane %v683, %v720
        %v722 = vmul.f32 %v716, %v721
        %v723 = vadd.f32 %v713, %v722
        %724 = vset.pattern.permute.xlu0 4
        %725 = vperm.xlu0 %724, %v678
        %v726 = vpop.permute.xlu0 %725
        %v728 = vlaneseq
        %v729 = vshrl.u32 %v728, 7
        %v730 = vsub.s32 4, %v729
        %v731 = vrot.slane %v683, %v730
        %v732 = vmul.f32 %v726, %v731
        %v733 = vadd.f32 %v723, %v732
        %734 = vset.pattern.permute.xlu0 5
        %735 = vperm.xlu0 %734, %v678
        %v736 = vpop.permute.xlu0 %735
        %v738 = vlaneseq
        %v739 = vshrl.u32 %v738, 7
        %v740 = vsub.s32 5, %v739
        %v741 = vrot.slane %v683, %v740
        %v742 = vmul.f32 %v736, %v741
        %v743 = vadd.f32 %v733, %v742
        %744 = vset.pattern.permute.xlu0 6
        %745 = vperm.xlu0 %744, %v678
        %v746 = vpop.permute.xlu0 %745
        %v748 = vlaneseq
        %v749 = vshrl.u32 %v748, 7
        %v750 = vsub.s32 6, %v749
        %v751 = vrot.slane %v683, %v750
        %v752 = vmul.f32 %v746, %v751
        %v753 = vadd.f32 %v743, %v752
        %754 = vset.pattern.permute.xlu0 7
        %755 = vperm.xlu0 %754, %v678
        %v756 = vpop.permute.xlu0 %755
        %v758 = vlaneseq
        %v759 = vshrl.u32 %v758, 7
        %v760 = vsub.s32 7, %v759
        %v761 = vrot.slane %v683, %v760
        %v762 = vmul.f32 %v756, %v761
        %v763 = vadd.f32 %v753, %v762
        %v764 = vstv %s670
        %v765 = vmul.f32 %v764, %v678
        %767 = vset.pattern.permute.xlu0 40
        %768 = vperm.xlu0 %767, %v765
        %v769 = vpop.permute.xlu0 %768
        %v771 = vadd.f32 %v763, %v769
        %772 = vset.pattern.permute.xlu0 8
        %773 = vperm.xlu0 %772, %v678
        %v774 = vpop.permute.xlu0 %773
        %v776 = vmul.f32 %v774, %v692
        %777 = vset.pattern.permute.xlu0 9
        %778 = vperm.xlu0 %777, %v678
        %v779 = vpop.permute.xlu0 %778
        %v781 = vmul.f32 %v779, %v701
        %v782 = vadd.f32 %v776, %v781
        %783 = vset.pattern.permute.xlu0 10
        %784 = vperm.xlu0 %783, %v678
        %v785 = vpop.permute.xlu0 %784
        %v787 = vmul.f32 %v785, %v711
        %v788 = vadd.f32 %v782, %v787
        %789 = vset.pattern.permute.xlu0 11
        %790 = vperm.xlu0 %789, %v678
        %v791 = vpop.permute.xlu0 %790
        %v793 = vmul.f32 %v791, %v721
        %v794 = vadd.f32 %v788, %v793
        %795 = vset.pattern.permute.xlu0 12
        %796 = vperm.xlu0 %795, %v678
        %v797 = vpop.permute.xlu0 %796
        %v799 = vmul.f32 %v797, %v731
        %v800 = vadd.f32 %v794, %v799
        %801 = vset.pattern.permute.xlu0 13
        %802 = vperm.xlu0 %801, %v678
        %v803 = vpop.permute.xlu0 %802
        %v805 = vmul.f32 %v803, %v741
        %v806 = vadd.f32 %v800, %v805
        %807 = vset.pattern.permute.xlu0 14
        %808 = vperm.xlu0 %807, %v678
        %v809 = vpop.permute.xlu0 %808
        %v811 = vmul.f32 %v809, %v751
        %v812 = vadd.f32 %v806, %v811
        %813 = vset.pattern.permute.xlu0 15
        %814 = vperm.xlu0 %813, %v678
        %v815 = vpop.permute.xlu0 %814
        %v817 = vmul.f32 %v815, %v761
        %v818 = vadd.f32 %v812, %v817
        %819 = vset.pattern.permute.xlu0 16
        %820 = vperm.xlu0 %819, %v678
        %v821 = vpop.permute.xlu0 %820
        %v823 = vlaneseq
        %v824 = vshrl.u32 %v823, 7
        %v825 = vsub.s32 0, %v824
        %v826 = vrot.slane %v771, %v825
        %v827 = vmul.f32 %v821, %v826
        %828 = vset.pattern.permute.xlu0 17
        %829 = vperm.xlu0 %828, %v678
        %v830 = vpop.permute.xlu0 %829
        %v832 = vlaneseq
        %v833 = vshrl.u32 %v832, 7
        %v834 = vsub.s32 1, %v833
        %v835 = vrot.slane %v771, %v834
        %v836 = vmul.f32 %v830, %v835
        %v837 = vadd.f32 %v827, %v836
        %838 = vset.pattern.permute.xlu0 18
        %839 = vperm.xlu0 %838, %v678
        %v840 = vpop.permute.xlu0 %839
        %v842 = vlaneseq
        %v843 = vshrl.u32 %v842, 7
        %v844 = vsub.s32 2, %v843
        %v845 = vrot.slane %v771, %v844
        %v846 = vmul.f32 %v840, %v845
        %v847 = vadd.f32 %v837, %v846
        %848 = vset.pattern.permute.xlu0 19
        %849 = vperm.xlu0 %848, %v678
        %v850 = vpop.permute.xlu0 %849
        %v852 = vlaneseq
        %v853 = vshrl.u32 %v852, 7
        %v854 = vsub.s32 3, %v853
        %v855 = vrot.slane %v771, %v854
        %v856 = vmul.f32 %v850, %v855
        %v857 = vadd.f32 %v847, %v856
        %858 = vset.pattern.permute.xlu0 20
        %859 = vperm.xlu0 %858, %v678
        %v860 = vpop.permute.xlu0 %859
        %v862 = vlaneseq
        %v863 = vshrl.u32 %v862, 7
        %v864 = vsub.s32 4, %v863
        %v865 = vrot.slane %v771, %v864
        %v866 = vmul.f32 %v860, %v865
        %v867 = vadd.f32 %v857, %v866
        %868 = vset.pattern.permute.xlu0 21
        %869 = vperm.xlu0 %868, %v678
        %v870 = vpop.permute.xlu0 %869
        %v872 = vlaneseq
        %v873 = vshrl.u32 %v872, 7
        %v874 = vsub.s32 5, %v873
        %v875 = vrot.slane %v771, %v874
        %v876 = vmul.f32 %v870, %v875
        %v877 = vadd.f32 %v867, %v876
        %878 = vset.pattern.permute.xlu0 22
        %879 = vperm.xlu0 %878, %v678
        %v880 = vpop.permute.xlu0 %879
        %v882 = vlaneseq
        %v883 = vshrl.u32 %v882, 7
        %v884 = vsub.s32 6, %v883
        %v885 = vrot.slane %v771, %v884
        %v886 = vmul.f32 %v880, %v885
        %v887 = vadd.f32 %v877, %v886
        %888 = vset.pattern.permute.xlu0 23
        %889 = vperm.xlu0 %888, %v678
        %v890 = vpop.permute.xlu0 %889
        %v892 = vlaneseq
        %v893 = vshrl.u32 %v892, 7
        %v894 = vsub.s32 7, %v893
        %v895 = vrot.slane %v771, %v894
        %v896 = vmul.f32 %v890, %v895
        %v897 = vadd.f32 %v887, %v896
        %v898 = vadd.f32 %v818, %v897
        %v899 = vstv %s662
        %v900 = vmul.f32 %v899, %v675
        %v901 = vstv %s666
        %v902 = vmul.f32 %v901, %v676
        %v903 = vadd.f32 %v900, %v902
        %v904 = vlaneseq
        %v905 = vshrl.u32 %v904, 7
        %v906 = vsub.s32 0, %v905
        %v907 = vrot.slane %v903, %v906
        %v908 = vmul.f32 %v687, %v907
        %v909 = vlaneseq
        %v910 = vshrl.u32 %v909, 7
        %v911 = vsub.s32 1, %v910
        %v912 = vrot.slane %v903, %v911
        %v913 = vmul.f32 %v696, %v912
        %v914 = vadd.f32 %v908, %v913
        %v915 = vlaneseq
        %v916 = vshrl.u32 %v915, 7
        %v917 = vsub.s32 2, %v916
        %v918 = vrot.slane %v903, %v917
        %v919 = vmul.f32 %v706, %v918
        %v920 = vadd.f32 %v914, %v919
        %v921 = vlaneseq
        %v922 = vshrl.u32 %v921, 7
        %v923 = vsub.s32 3, %v922
        %v924 = vrot.slane %v903, %v923
        %v925 = vmul.f32 %v716, %v924
        %v926 = vadd.f32 %v920, %v925
        %v927 = vlaneseq
        %v928 = vshrl.u32 %v927, 7
        %v929 = vsub.s32 4, %v928
        %v930 = vrot.slane %v903, %v929
        %v931 = vmul.f32 %v726, %v930
        %v932 = vadd.f32 %v926, %v931
        %v933 = vlaneseq
        %v934 = vshrl.u32 %v933, 7
        %v935 = vsub.s32 5, %v934
        %v936 = vrot.slane %v903, %v935
        %v937 = vmul.f32 %v736, %v936
        %v938 = vadd.f32 %v932, %v937
        %v939 = vlaneseq
        %v940 = vshrl.u32 %v939, 7
        %v941 = vsub.s32 6, %v940
        %v942 = vrot.slane %v903, %v941
        %v943 = vmul.f32 %v746, %v942
        %v944 = vadd.f32 %v938, %v943
        %v945 = vlaneseq
        %v946 = vshrl.u32 %v945, 7
        %v947 = vsub.s32 7, %v946
        %v948 = vrot.slane %v903, %v947
        %v949 = vmul.f32 %v756, %v948
        %v950 = vadd.f32 %v944, %v949
        %v951 = vstv %s674
        %v952 = vmul.f32 %v951, %v678
        %954 = vset.pattern.permute.xlu0 40
        %955 = vperm.xlu0 %954, %v952
        %v956 = vpop.permute.xlu0 %955
        %v958 = vadd.f32 %v950, %v956
        %v959 = vmax.f32 %v677, 0.0
        %v960 = vfloor.f32 %v959
        %vm961 = vcmp.eq.f32.partialorder %v960, 0.0
        %v962 = vsel %vm961, 1, 0
        %v963 = vcvt.s32.f32 %v962
        %964 = vset.pattern.permute.xlu0 24
        %965 = vperm.xlu0 %964, %v678
        %v966 = vpop.permute.xlu0 %965
        %v968 = vlaneseq
        %v969 = vshrl.u32 %v968, 7
        %v970 = vsub.s32 0, %v969
        %v971 = vrot.slane %v963, %v970
        %v972 = vmul.f32 %v966, %v971
        %vm973 = vcmp.eq.f32.partialorder %v960, 1.0
        %v974 = vsel %vm973, 1, 0
        %v975 = vcvt.s32.f32 %v974
        %976 = vset.pattern.permute.xlu0 25
        %977 = vperm.xlu0 %976, %v678
        %v978 = vpop.permute.xlu0 %977
        %v980 = vlaneseq
        %v981 = vshrl.u32 %v980, 7
        %v982 = vsub.s32 0, %v981
        %v983 = vrot.slane %v975, %v982
        %v984 = vmul.f32 %v978, %v983
        %v985 = vadd.f32 %v972, %v984
        %986 = vset.pattern.permute.xlu0 26
        %987 = vperm.xlu0 %986, %v678
        %v988 = vpop.permute.xlu0 %987
        %v990 = vlaneseq
        %v991 = vshrl.u32 %v990, 7
        %v992 = vsub.s32 4, %v991
        %v993 = vrot.slane %v963, %v992
        %v994 = vmul.f32 %v988, %v993
        %995 = vset.pattern.permute.xlu0 27
        %996 = vperm.xlu0 %995, %v678
        %v997 = vpop.permute.xlu0 %996
        %v999 = vlaneseq
        %v1000 = vshrl.u32 %v999, 7
        %v1001 = vsub.s32 4, %v1000
        %v1002 = vrot.slane %v975, %v1001
        %v1003 = vmul.f32 %v997, %v1002
        %v1004 = vadd.f32 %v994, %v1003
        %v1005 = vadd.f32 %v985, %v1004
        %v1006 = vmul.f32 %v774, %v907
        %v1007 = vmul.f32 %v779, %v912
        %v1008 = vadd.f32 %v1006, %v1007
        %v1009 = vmul.f32 %v785, %v918
        %v1010 = vadd.f32 %v1008, %v1009
        %v1011 = vmul.f32 %v791, %v924
        %v1012 = vadd.f32 %v1010, %v1011
        %v1013 = vmul.f32 %v797, %v930
        %v1014 = vadd.f32 %v1012, %v1013
        %v1015 = vmul.f32 %v803, %v936
        %v1016 = vadd.f32 %v1014, %v1015
        %v1017 = vmul.f32 %v809, %v942
        %v1018 = vadd.f32 %v1016, %v1017
        %v1019 = vmul.f32 %v815, %v948
        %v1020 = vadd.f32 %v1018, %v1019
        %v1021 = vlaneseq
        %v1022 = vshrl.u32 %v1021, 7
        %v1023 = vsub.s32 0, %v1022
        %v1024 = vrot.slane %v958, %v1023
        %v1025 = vmul.f32 %v821, %v1024
        %v1026 = vlaneseq
        %v1027 = vshrl.u32 %v1026, 7
        %v1028 = vsub.s32 1, %v1027
        %v1029 = vrot.slane %v958, %v1028
        %v1030 = vmul.f32 %v830, %v1029
        %v1031 = vadd.f32 %v1025, %v1030
        %v1032 = vlaneseq
        %v1033 = vshrl.u32 %v1032, 7
        %v1034 = vsub.s32 2, %v1033
        %v1035 = vrot.slane %v958, %v1034
        %v1036 = vmul.f32 %v840, %v1035
        %v1037 = vadd.f32 %v1031, %v1036
        %v1038 = vlaneseq
        %v1039 = vshrl.u32 %v1038, 7
        %v1040 = vsub.s32 3, %v1039
        %v1041 = vrot.slane %v958, %v1040
        %v1042 = vmul.f32 %v850, %v1041
        %v1043 = vadd.f32 %v1037, %v1042
        %v1044 = vlaneseq
        %v1045 = vshrl.u32 %v1044, 7
        %v1046 = vsub.s32 4, %v1045
        %v1047 = vrot.slane %v958, %v1046
        %v1048 = vmul.f32 %v860, %v1047
        %v1049 = vadd.f32 %v1043, %v1048
        %v1050 = vlaneseq
        %v1051 = vshrl.u32 %v1050, 7
        %v1052 = vsub.s32 5, %v1051
        %v1053 = vrot.slane %v958, %v1052
        %v1054 = vmul.f32 %v870, %v1053
        %v1055 = vadd.f32 %v1049, %v1054
        %v1056 = vlaneseq
        %v1057 = vshrl.u32 %v1056, 7
        %v1058 = vsub.s32 6, %v1057
        %v1059 = vrot.slane %v958, %v1058
        %v1060 = vmul.f32 %v880, %v1059
        %v1061 = vadd.f32 %v1055, %v1060
        %v1062 = vlaneseq
        %v1063 = vshrl.u32 %v1062, 7
        %v1064 = vsub.s32 7, %v1063
        %v1065 = vrot.slane %v958, %v1064
        %v1066 = vmul.f32 %v890, %v1065
        %v1067 = vadd.f32 %v1061, %v1066
        %v1068 = vadd.f32 %v1020, %v1067
        %v1069 = vadd.f32 %v1068, %v1005
        %v1070 = vmul.f32 %v679, %v1069
        %v1071 = vadd.f32 %v1070, %v682
        %v1072 = vlaneseq
        %v1073 = vshrl.u32 %v1072, 7
        %v1074 = vsub.s32 0, %v1073
        %v1075 = vrot.slane %v1071, %v1074
        %v1076 = vmul.f32 %v687, %v1075
        %v1077 = vlaneseq
        %v1078 = vshrl.u32 %v1077, 7
        %v1079 = vsub.s32 1, %v1078
        %v1080 = vrot.slane %v1071, %v1079
        %v1081 = vmul.f32 %v696, %v1080
        %v1082 = vadd.f32 %v1076, %v1081
        %v1083 = vlaneseq
        %v1084 = vshrl.u32 %v1083, 7
        %v1085 = vsub.s32 2, %v1084
        %v1086 = vrot.slane %v1071, %v1085
        %v1087 = vmul.f32 %v706, %v1086
        %v1088 = vadd.f32 %v1082, %v1087
        %v1089 = vlaneseq
        %v1090 = vshrl.u32 %v1089, 7
        %v1091 = vsub.s32 3, %v1090
        %v1092 = vrot.slane %v1071, %v1091
        %v1093 = vmul.f32 %v716, %v1092
        %v1094 = vadd.f32 %v1088, %v1093
        %v1095 = vlaneseq
        %v1096 = vshrl.u32 %v1095, 7
        %v1097 = vsub.s32 4, %v1096
        %v1098 = vrot.slane %v1071, %v1097
        %v1099 = vmul.f32 %v726, %v1098
        %v1100 = vadd.f32 %v1094, %v1099
        %v1101 = vlaneseq
        %v1102 = vshrl.u32 %v1101, 7
        %v1103 = vsub.s32 5, %v1102
        %v1104 = vrot.slane %v1071, %v1103
        %v1105 = vmul.f32 %v736, %v1104
        %v1106 = vadd.f32 %v1100, %v1105
        %v1107 = vlaneseq
        %v1108 = vshrl.u32 %v1107, 7
        %v1109 = vsub.s32 6, %v1108
        %v1110 = vrot.slane %v1071, %v1109
        %v1111 = vmul.f32 %v746, %v1110
        %v1112 = vadd.f32 %v1106, %v1111
        %v1113 = vlaneseq
        %v1114 = vshrl.u32 %v1113, 7
        %v1115 = vsub.s32 7, %v1114
        %v1116 = vrot.slane %v1071, %v1115
        %v1117 = vmul.f32 %v756, %v1116
        %v1118 = vadd.f32 %v1112, %v1117
        %v1119 = vadd.f32 %v1118, %v769
        %v1120 = vmul.f32 %v774, %v1075
        %v1121 = vmul.f32 %v779, %v1080
        %v1122 = vadd.f32 %v1120, %v1121
        %v1123 = vmul.f32 %v785, %v1086
        %v1124 = vadd.f32 %v1122, %v1123
        %v1125 = vmul.f32 %v791, %v1092
        %v1126 = vadd.f32 %v1124, %v1125
        %v1127 = vmul.f32 %v797, %v1098
        %v1128 = vadd.f32 %v1126, %v1127
        %v1129 = vmul.f32 %v803, %v1104
        %v1130 = vadd.f32 %v1128, %v1129
        %v1131 = vmul.f32 %v809, %v1110
        %v1132 = vadd.f32 %v1130, %v1131
        %v1133 = vmul.f32 %v815, %v1116
        %v1134 = vadd.f32 %v1132, %v1133
        %v1135 = vlaneseq
        %v1136 = vshrl.u32 %v1135, 7
        %v1137 = vsub.s32 0, %v1136
        %v1138 = vrot.slane %v1119, %v1137
        %v1139 = vmul.f32 %v821, %v1138
        %v1140 = vlaneseq
        %v1141 = vshrl.u32 %v1140, 7
        %v1142 = vsub.s32 1, %v1141
        %v1143 = vrot.slane %v1119, %v1142
        %v1144 = vmul.f32 %v830, %v1143
        %v1145 = vadd.f32 %v1139, %v1144
        %v1146 = vlaneseq
        %v1147 = vshrl.u32 %v1146, 7
        %v1148 = vsub.s32 2, %v1147
        %v1149 = vrot.slane %v1119, %v1148
        %v1150 = vmul.f32 %v840, %v1149
        %v1151 = vadd.f32 %v1145, %v1150
        %v1152 = vlaneseq
        %v1153 = vshrl.u32 %v1152, 7
        %v1154 = vsub.s32 3, %v1153
        %v1155 = vrot.slane %v1119, %v1154
        %v1156 = vmul.f32 %v850, %v1155
        %v1157 = vadd.f32 %v1151, %v1156
        %v1158 = vlaneseq
        %v1159 = vshrl.u32 %v1158, 7
        %v1160 = vsub.s32 4, %v1159
        %v1161 = vrot.slane %v1119, %v1160
        %v1162 = vmul.f32 %v860, %v1161
        %v1163 = vadd.f32 %v1157, %v1162
        %v1164 = vlaneseq
        %v1165 = vshrl.u32 %v1164, 7
        %v1166 = vsub.s32 5, %v1165
        %v1167 = vrot.slane %v1119, %v1166
        %v1168 = vmul.f32 %v870, %v1167
        %v1169 = vadd.f32 %v1163, %v1168
        %v1170 = vlaneseq
        %v1171 = vshrl.u32 %v1170, 7
        %v1172 = vsub.s32 6, %v1171
        %v1173 = vrot.slane %v1119, %v1172
        %v1174 = vmul.f32 %v880, %v1173
        %v1175 = vadd.f32 %v1169, %v1174
        %v1176 = vlaneseq
        %v1177 = vshrl.u32 %v1176, 7
        %v1178 = vsub.s32 7, %v1177
        %v1179 = vrot.slane %v1119, %v1178
        %v1180 = vmul.f32 %v890, %v1179
        %v1181 = vadd.f32 %v1175, %v1180
        %v1182 = vadd.f32 %v1134, %v1181
        %v1183 = vpack.c.bf16 %v683, %v683
        %1184 = vst [vmem:[%s596] sm:$0xf] %v1183
        %v1185 = vpack.c.bf16 %v771, %v771
        %1186 = vst [vmem:[%s605] sm:$0xf] %v1185
        %v1187 = vpack.c.bf16 %v958, %v958
        %1188 = vst [vmem:[%s614] sm:$0xf] %v1187
        %v1189 = vpack.c.bf16 %v898, %v898
        %1190 = vst [vmem:[%s623] sm:$0xf] %v1189
        %v1191 = vpack.c.bf16 %v1069, %v1069
        %1192 = vst [vmem:[%s632] sm:$0xf] %v1191
        %v1193 = vpack.c.bf16 %v1182, %v1182
        %1194 = vst [vmem:[%s641] sm:$0xf] %v1193
        %v1195 = vsub.f32 %v676, %v958
        %v1196 = vand.u32 2147483647, %v1195
        %1197 = vadd.xlane.f32.xlu0 %v1196
        %v1198 = vpop.xlane.xlu0 %1197
        %v1199 = vrot.slane %v1198, 4
        %v1200 = vadd.f32 %v1198, %v1199
        %v1201 = vrot.slane %v1200, 2
        %v1202 = vadd.f32 %v1200, %v1201
        %v1203 = vrot.slane %v1202, 1
        %v1204 = vadd.f32 %v1202, %v1203
        %s1205 = vtos %v1204
        %v1206 = vsub.f32 %v1182, %v677
        %v1207 = vand.u32 2147483647, %v1206
        %1208 = vadd.xlane.f32.xlu0 %v1207
        %v1209 = vpop.xlane.xlu0 %1208
        %v1210 = vrot.slane %v1209, 4
        %v1211 = vadd.f32 %v1209, %v1210
        %v1212 = vrot.slane %v1211, 2
        %v1213 = vadd.f32 %v1211, %v1212
        %v1214 = vrot.slane %v1213, 1
        %v1215 = vadd.f32 %v1213, %v1214
        %s1216 = vtos %v1215
        %v1217 = vlaneseq
        %v1218 = vshrl.u32 %v1217, 7
        %vm1219 = vcmp.eq.s32.totalorder %v1218, 0
        %v1220 = vstv %s1205
        %v1221 = vstv %s1216
        %v1222 = vsel %vm1219, %v1220, %v1221
        %p1223 = scmp.eq.s32.totalorder %s31, 0
        // Predicated region
        $region45: #{_p_losses_impl.1} parent=39 // pred_check
          %p1224 = pneg %p1223
        $region46: #{_p_losses_impl.1} parent=39 // pred_check_branch
          %1226 = sbr.rel (%p1224) target = $region48
        $region47: #{_p_losses_impl.1} parent=39 // pred_region
          %1227 = vst [vmem:[%s649] sm:$0x3] 0.0
        $region48: #{_p_losses_impl.1} parent=39 // pred_fallthru
          _
        %v1228 = vld [vmem:[%s649] sm:$0x3]
        %v1229 = vadd.f32 %v1228, %v1222
        %1230 = vst [vmem:[%s649] sm:$0x3] %v1229
        %s1231 = sadd.s32 %s30, %s31
        %p1232 = scmp.lt.s32.totalorder %s29, 1
        %s1233 = scalar_select %p1232, %s29, 1
        %p1234 = scmp.lt.s32.totalorder %s1231, 0
        %s1235 = scalar_select %p1234, %s1231, 0
        %s1236 = sadd.s32 %s1235, %s1233
        %s1237 = smul.addr %s1236, 4
        %s1238 = scalar_lea.vmem %s5, %s1237
        %s1239 = sadd.s32 %s30, %s31
        %p1240 = scmp.lt.s32.totalorder %s29, 1
        %s1241 = scalar_select %p1240, %s29, 1
        %p1242 = scmp.lt.s32.totalorder %s1239, 0
        %s1243 = scalar_select %p1242, %s1239, 0
        %s1244 = sadd.s32 %s1243, %s1241
        %s1245 = smul.addr %s1244, 4
        %s1246 = scalar_lea.vmem %s6, %s1245
        %s1247 = sadd.s32 %s30, %s31
        %p1248 = scmp.lt.s32.totalorder %s29, 1
        %s1249 = scalar_select %p1248, %s29, 1
        %p1250 = scmp.lt.s32.totalorder %s1247, 0
        %s1251 = scalar_select %p1250, %s1247, 0
        %s1252 = sadd.s32 %s1251, %s1249
        %s1253 = smul.addr %s1252, 4
        %s1254 = scalar_lea.vmem %s7, %s1253
        %s1255 = sadd.s32 %s30, %s31
        %p1256 = scmp.lt.s32.totalorder %s29, 1
        %s1257 = scalar_select %p1256, %s29, 1
        %p1258 = scmp.lt.s32.totalorder %s1255, 0
        %s1259 = scalar_select %p1258, %s1255, 0
        %s1260 = sadd.s32 %s1259, %s1257
        %s1261 = smul.addr %s1260, 4
        %s1262 = scalar_lea.vmem %s8, %s1261
        %s1263 = sadd.s32 %s30, %s31
        %p1264 = scmp.lt.s32.totalorder %s29, 1
        %s1265 = scalar_select %p1264, %s29, 1
        %p1266 = scmp.lt.s32.totalorder %s1263, 0
        %s1267 = scalar_select %p1266, %s1263, 0
        %s1268 = sadd.s32 %s1267, %s1265
        %s1269 = smul.addr %s1268, 4
        %s1270 = scalar_lea.vmem %s9, %s1269
        %s1271 = sadd.s32 %s30, %s31
        %p1272 = scmp.lt.s32.totalorder %s29, 1
        %s1273 = scalar_select %p1272, %s29, 1
        %p1274 = scmp.lt.s32.totalorder %s1271, 0
        %s1275 = scalar_select %p1274, %s1271, 0
        %s1276 = sadd.s32 %s1275, %s1273
        %s1277 = smul.addr %s1276, 4
        %s1278 = scalar_lea.vmem %s10, %s1277
        %p1279 = scmp.lt.s32.totalorder %s29, 1
        %s1280 = scalar_select %p1279, %s29, 1
        %p1281 = scmp.lt.s32.totalorder %s30, 0
        %s1282 = scalar_select %p1281, %s30, 0
        %s1283 = sadd.s32 %s1282, %s1280
        %s1284 = smul.addr %s1283, 2
        %s1285 = scalar_lea.vmem %s11, %s1284
        // Predicated region
        $region49: #{_p_losses_impl.1} parent=39 // pred_check
          %p1286 = pneg %p197
        $region50: #{_p_losses_impl.1} parent=39 // pred_check_branch
          %1288 = sbr.rel (%p1286) target = $region52
        $region51: #{_p_losses_impl.1} parent=39 // pred_region
          %s1289 = sadd.s32 %s30, %s31
        $region52: #{_p_losses_impl.1} parent=39 // pred_fallthru
          _
        // Predicated region
        $region53: #{_p_losses_impl.1} parent=39 // pred_check
          %p1290 = pneg %p227
        $region54: #{_p_losses_impl.1} parent=39 // pred_check_branch
          %1292 = sbr.rel (%p1290) target = $region56
        $region55: #{_p_losses_impl.1} parent=39 // pred_region
          %s1293 = sadd.s32 %s30, %s31
        $region56: #{_p_losses_impl.1} parent=39 // pred_fallthru
          _
        // Predicated region
        $region57: #{_p_losses_impl.1} parent=39 // pred_check
          %p1294 = pneg %p257
        $region58: #{_p_losses_impl.1} parent=39 // pred_check_branch
          %1296 = sbr.rel (%p1294) target = $region60
        $region59: #{_p_losses_impl.1} parent=39 // pred_region
          %s1297 = sadd.s32 %s30, %s31
        $region60: #{_p_losses_impl.1} parent=39 // pred_fallthru
          _
        // Predicated region
        $region61: #{_p_losses_impl.1} parent=39 // pred_check
          %p1298 = pneg %p287
        $region62: #{_p_losses_impl.1} parent=39 // pred_check_branch
          %1300 = sbr.rel (%p1298) target = $region64
        $region63: #{_p_losses_impl.1} parent=39 // pred_region
          %s1301 = sadd.s32 %s30, %s31
        $region64: #{_p_losses_impl.1} parent=39 // pred_fallthru
          _
        // Predicated region
        $region65: #{_p_losses_impl.1} parent=39 // pred_check
          %p1302 = pneg %p317
        $region66: #{_p_losses_impl.1} parent=39 // pred_check_branch
          %1304 = sbr.rel (%p1302) target = $region68
        $region67: #{_p_losses_impl.1} parent=39 // pred_region
          %s1305 = sadd.s32 %s30, %s31
        $region68: #{_p_losses_impl.1} parent=39 // pred_fallthru
          _
        // Predicated region
        $region69: #{_p_losses_impl.1} parent=39 // pred_check
          %p1306 = pneg %p347
        $region70: #{_p_losses_impl.1} parent=39 // pred_check_branch
          %1308 = sbr.rel (%p1306) target = $region72
        $region71: #{_p_losses_impl.1} parent=39 // pred_region
          %s1309 = sadd.s32 %s30, %s31
        $region72: #{_p_losses_impl.1} parent=39 // pred_fallthru
          _
        // Predicated region
        $region73: #{_p_losses_impl.1} parent=39 // pred_check
          %p1310 = pneg %p375
        $region74: #{_p_losses_impl.1} parent=39 // pred_check_branch
          %1312 = sbr.rel (%p1310) target = $region76
        $region75: #{_p_losses_impl.1} parent=39 // pred_region
          _
        $region76: #{_p_losses_impl.1} parent=39 // pred_fallthru
          _
      $region40: #{_p_losses_impl.1} parent=5 // pred_fallthru
        _
      %p1313 = scmp.le.s32.totalorder 2, %s19
      // Predicated region
      $region77: #{_p_losses_impl.1} parent=5 // pred_check
        %p1314 = pneg %p1313
      $region78: #{_p_losses_impl.1} parent=5 // pred_check_branch
        %1316 = sbr.rel (%p1314) target = $region80
      $region79: #{_p_losses_impl.1} parent=5 // pred_region
        %s1317 = ssub.s32 %s19, 2
        // Predicated region
        $region81: #{_p_losses_impl.1} parent=79 // pred_check
          %p1318 = pneg %p203
        $region82: #{_p_losses_impl.1} parent=79 // pred_check_branch
          %1320 = sbr.rel (%p1318) target = $region84
        $region83: #{_p_losses_impl.1} parent=79 // pred_region
          %s1321 = sadd.s32 %s33, %s34
          %p1322 = scmp.lt.s32.totalorder %s32, 1
          %s1323 = scalar_select %p1322, %s32, 1
          %p1324 = scmp.lt.s32.totalorder %s1321, 0
          %s1325 = scalar_select %p1324, %s1321, 0
          %s1326 = sadd.s32 %s1325, %s1323
          %s1327 = smul.addr %s1326, 4
          %s1328 = scalar_lea.vmem %s5, %s1327
        $region84: #{_p_losses_impl.1} parent=79 // pred_fallthru
          _
        // Predicated region
        $region85: #{_p_losses_impl.1} parent=79 // pred_check
          %p1329 = pneg %p233
        $region86: #{_p_losses_impl.1} parent=79 // pred_check_branch
          %1331 = sbr.rel (%p1329) target = $region88
        $region87: #{_p_losses_impl.1} parent=79 // pred_region
          %s1332 = sadd.s32 %s33, %s34
          %p1333 = scmp.lt.s32.totalorder %s32, 1
          %s1334 = scalar_select %p1333, %s32, 1
          %p1335 = scmp.lt.s32.totalorder %s1332, 0
          %s1336 = scalar_select %p1335, %s1332, 0
          %s1337 = sadd.s32 %s1336, %s1334
          %s1338 = smul.addr %s1337, 4
          %s1339 = scalar_lea.vmem %s6, %s1338
        $region88: #{_p_losses_impl.1} parent=79 // pred_fallthru
          _
        // Predicated region
        $region89: #{_p_losses_impl.1} parent=79 // pred_check
          %p1340 = pneg %p263
        $region90: #{_p_losses_impl.1} parent=79 // pred_check_branch
          %1342 = sbr.rel (%p1340) target = $region92
        $region91: #{_p_losses_impl.1} parent=79 // pred_region
          %s1343 = sadd.s32 %s33, %s34
          %p1344 = scmp.lt.s32.totalorder %s32, 1
          %s1345 = scalar_select %p1344, %s32, 1
          %p1346 = scmp.lt.s32.totalorder %s1343, 0
          %s1347 = scalar_select %p1346, %s1343, 0
          %s1348 = sadd.s32 %s1347, %s1345
          %s1349 = smul.addr %s1348, 4
          %s1350 = scalar_lea.vmem %s7, %s1349
        $region92: #{_p_losses_impl.1} parent=79 // pred_fallthru
          _
        // Predicated region
        $region93: #{_p_losses_impl.1} parent=79 // pred_check
          %p1351 = pneg %p293
        $region94: #{_p_losses_impl.1} parent=79 // pred_check_branch
          %1353 = sbr.rel (%p1351) target = $region96
        $region95: #{_p_losses_impl.1} parent=79 // pred_region
          %s1354 = sadd.s32 %s33, %s34
          %p1355 = scmp.lt.s32.totalorder %s32, 1
          %s1356 = scalar_select %p1355, %s32, 1
          %p1357 = scmp.lt.s32.totalorder %s1354, 0
          %s1358 = scalar_select %p1357, %s1354, 0
          %s1359 = sadd.s32 %s1358, %s1356
          %s1360 = smul.addr %s1359, 4
          %s1361 = scalar_lea.vmem %s8, %s1360
        $region96: #{_p_losses_impl.1} parent=79 // pred_fallthru
          _
        // Predicated region
        $region97: #{_p_losses_impl.1} parent=79 // pred_check
          %p1362 = pneg %p323
        $region98: #{_p_losses_impl.1} parent=79 // pred_check_branch
          %1364 = sbr.rel (%p1362) target = $region100
        $region99: #{_p_losses_impl.1} parent=79 // pred_region
          %s1365 = sadd.s32 %s33, %s34
          %p1366 = scmp.lt.s32.totalorder %s32, 1
          %s1367 = scalar_select %p1366, %s32, 1
          %p1368 = scmp.lt.s32.totalorder %s1365, 0
          %s1369 = scalar_select %p1368, %s1365, 0
          %s1370 = sadd.s32 %s1369, %s1367
          %s1371 = smul.addr %s1370, 4
          %s1372 = scalar_lea.vmem %s9, %s1371
        $region100: #{_p_losses_impl.1} parent=79 // pred_fallthru
          _
        // Predicated region
        $region101: #{_p_losses_impl.1} parent=79 // pred_check
          %p1373 = pneg %p353
        $region102: #{_p_losses_impl.1} parent=79 // pred_check_branch
          %1375 = sbr.rel (%p1373) target = $region104
        $region103: #{_p_losses_impl.1} parent=79 // pred_region
          %s1376 = sadd.s32 %s33, %s34
          %p1377 = scmp.lt.s32.totalorder %s32, 1
          %s1378 = scalar_select %p1377, %s32, 1
          %p1379 = scmp.lt.s32.totalorder %s1376, 0
          %s1380 = scalar_select %p1379, %s1376, 0
          %s1381 = sadd.s32 %s1380, %s1378
          %s1382 = smul.addr %s1381, 4
          %s1383 = scalar_lea.vmem %s10, %s1382
        $region104: #{_p_losses_impl.1} parent=79 // pred_fallthru
          _
        // Predicated region
        $region105: #{_p_losses_impl.1} parent=79 // pred_check
          %p1384 = pneg %p381
        $region106: #{_p_losses_impl.1} parent=79 // pred_check_branch
          %1386 = sbr.rel (%p1384) target = $region108
        $region107: #{_p_losses_impl.1} parent=79 // pred_region
          %p1387 = scmp.lt.s32.totalorder %s32, 1
          %s1388 = scalar_select %p1387, %s32, 1
          %p1389 = scmp.lt.s32.totalorder %s33, 0
          %s1390 = scalar_select %p1389, %s33, 0
          %s1391 = sadd.s32 %s1390, %s1388
          %s1392 = smul.addr %s1391, 2
          %s1393 = scalar_lea.vmem %s11, %s1392
        $region108: #{_p_losses_impl.1} parent=79 // pred_fallthru
          _
      $region80: #{_p_losses_impl.1} parent=5 // pred_fallthru
        _
    $region6: #{_p_losses_impl.1} parent=1 // loop_footer
      %s23 = sadd.s32 1, %s19
    $region7: #{_p_losses_impl.1} parent=1 // loop_footer_branch
      %18 = sbr.rel target = $region3
    $region8: #{_p_losses_impl.1} parent=1 // loop_exit
      _
    %1394 = vsyncpa [#allocation3], 1
    %s1395 = scalar_lea.sflag [#allocation3], 1
    %1396 = vsyncpa %s1395, 1

</llo_original>
